<compile_context>
chip_gen: v7x
topology: tpu7x:2x2x1
jax: 0.10.0
libtpu: 0.0.40
codegen_flags: <defaults>
</compile_context>

<pallas_src>
import jax
import jax.numpy as jnp
from jax import lax
from jax.experimental import pallas as pl
from jax.experimental.pallas import tpu as pltpu


def basic_block_kernel(x_ref, w1_ref, b1_ref, w2_ref, b2_ref, o_ref, pad_ref):
    """One batch element per grid step. x_ref: (1, C, H, W); pad_ref: (P0, H+2, W+2)."""
    _, C, H, W = x_ref.shape
    P0 = w1_ref.shape[0]      # planes[0]
    P1 = w2_ref.shape[0]      # planes[1] (== C for the residual)

    # ---- zero only the 1-px border of the pad scratch -----------------------
    # (interior is fully overwritten below, so no full-buffer memset needed)
    zrow = jnp.zeros((P0, 1, W + 2), jnp.float32)
    zcol = jnp.zeros((P0, H + 2, 1), jnp.float32)
    pad_ref[:, 0:1, :] = zrow
    pad_ref[:, H + 1:H + 2, :] = zrow
    pad_ref[:, :, 0:1] = zcol
    pad_ref[:, :, W + 1:W + 2] = zcol

    # Load each input channel plane once; reused by conv1x1 and the residual add.
    x_planes = [x_ref[0, c] for c in range(C)]

    # ---- conv1x1 (BN1 scale pre-folded) + bias + LeakyReLU(0.1) --------------
    # Unrolled scalar-broadcast MACs on the VPU (C*P0 = 8 MACs/pixel).
    for p0 in range(P0):
        acc = None
        for c in range(C):
            term = w1_ref[p0, c] * x_planes[c]
            acc = term if acc is None else acc + term
        h = acc + b1_ref[p0]
        h = jnp.maximum(h, 0.1 * h)                     # LeakyReLU(0.1)
        pad_ref[p0, 1:H + 1, 1:W + 1] = h               # interior of padded plane

    # ---- conv3x3, padding=1 (BN2 scale pre-folded) ---------------------------
    # 9 taps per input plane, read as static ref views (no reshape, no copies);
    # each tap is loaded once and fanned out to every output channel.
    accs = [None] * P1
    for p0 in range(P0):
        for ky in range(3):
            for kx in range(3):
                tap = pad_ref[p0, ky:ky + H, kx:kx + W]     # (H, W) window view
                widx = p0 * 9 + ky * 3 + kx
                for p1 in range(P1):
                    term = w2_ref[p1, widx] * tap
                    accs[p1] = term if accs[p1] is None else accs[p1] + term

    # ---- bias + LeakyReLU(0.1) + residual add, per output channel -----------
    for p1 in range(P1):
        y = accs[p1] + b2_ref[p1]
        y = jnp.maximum(y, 0.1 * y)                     # LeakyReLU(0.1)
        o_ref[0, p1] = (y + x_planes[p1]).astype(o_ref.dtype)


def fold_bn(gamma, beta, mean, var, eps=1e-5):
    scale = gamma / jnp.sqrt(var + eps)
    bias = beta - mean * scale
    return scale, bias


@jax.jit
def basic_block(x_nchw, params):
    """x_nchw: (N, C, H, W) float32; params: dict of conv weights / BN stats."""
    N, C, H, W = x_nchw.shape
    w1 = params["w1"]            # (P0, C, 1, 1) torch OIHW
    w2 = params["w2"]            # (P1, P0, 3, 3) torch OIHW
    P0 = w1.shape[0]
    P1 = w2.shape[0]
    assert P1 == C, "residual add requires planes[1] == inplanes"

    s1, b1 = fold_bn(params["g1"], params["be1"], params["m1"], params["v1"])
    s2, b2 = fold_bn(params["g2"], params["be2"], params["m2"], params["v2"])

    # Fold BN scales into the conv weights (exact math); flatten 3x3 taps for SMEM.
    w1_k = (w1[:, :, 0, 0] * s1[:, None]).astype(jnp.float32)                 # (P0, C)
    w2_k = (w2 * s2[:, None, None, None]).reshape(P1, P0 * 9).astype(jnp.float32)
    b1_k = b1.astype(jnp.float32)                                             # (P0,)
    b2_k = b2.astype(jnp.float32)                                             # (P1,)

    x = x_nchw.astype(jnp.float32)
    smem_spec = pl.BlockSpec(memory_space=pltpu.MemorySpace.SMEM)

    return pl.pallas_call(
        basic_block_kernel,
        out_shape=jax.ShapeDtypeStruct((N, C, H, W), jnp.float32),
        grid_spec=pltpu.PrefetchScalarGridSpec(
            num_scalar_prefetch=0,
            grid=(N,),
            in_specs=[
                pl.BlockSpec((1, C, H, W), lambda n: (n, 0, 0, 0)),   # x
                smem_spec,                                            # w1 (P0, C)
                smem_spec,                                            # bias1 (P0,)
                smem_spec,                                            # w2 (P1, P0*9)
                smem_spec,                                            # bias2 (P1,)
            ],
            out_specs=pl.BlockSpec((1, C, H, W), lambda n: (n, 0, 0, 0)),
            scratch_shapes=[pltpu.VMEM((P0, H + 2, W + 2), jnp.float32)],
        ),
        compiler_params=pltpu.CompilerParams(
            dimension_semantics=("parallel",)),
    )(x, w1_k, b1_k, w2_k, b2_k)


def reference_block(x, p, eps=1e-5):
    """Pure-JAX reference (NCHW, identical math) for verification."""
    dn = ("NCHW", "OIHW", "NCHW")
    y = lax.conv_general_dilated(x, p["w1"], (1, 1), "VALID",
                                 dimension_numbers=dn)
    y = (p["g1"][None, :, None, None] *
         (y - p["m1"][None, :, None, None]) /
         jnp.sqrt(p["v1"] + eps)[None, :, None, None] +
         p["be1"][None, :, None, None])
    y = jnp.where(y >= 0, y, 0.1 * y)
    y = lax.conv_general_dilated(y, p["w2"], (1, 1), ((1, 1), (1, 1)),
                                 dimension_numbers=dn)
    y = (p["g2"][None, :, None, None] *
         (y - p["m2"][None, :, None, None]) /
         jnp.sqrt(p["v2"] + eps)[None, :, None, None] +
         p["be2"][None, :, None, None])
    y = jnp.where(y >= 0, y, 0.1 * y)
    return y + x


if __name__ == "__main__":
    # Small shapes consistent with the module: inplanes=4, planes=[2, 4]
    N, C, H, W = 2, 4, 16, 16
    P0, P1 = 2, 4

    key = jax.random.PRNGKey(0)
    ks = jax.random.split(key, 8)

    x = jax.random.normal(ks[0], (N, C, H, W), jnp.float32)

    params = {
        # conv weights (torch OIHW, bias=False)
        "w1": jax.random.normal(ks[1], (P0, C, 1, 1), jnp.float32) * 0.3,
        "w2": jax.random.normal(ks[2], (P1, P0, 3, 3), jnp.float32) * 0.3,
        # BN1 params / running stats
        "g1": 1.0 + 0.1 * jax.random.normal(ks[3], (P0,), jnp.float32),
        "be1": 0.1 * jax.random.normal(ks[4], (P0,), jnp.float32),
        "m1": 0.05 * jnp.arange(P0, dtype=jnp.float32),
        "v1": 1.0 + 0.1 * jnp.arange(P0, dtype=jnp.float32),
        # BN2 params / running stats
        "g2": 1.0 + 0.1 * jax.random.normal(ks[5], (P1,), jnp.float32),
        "be2": 0.1 * jax.random.normal(ks[6], (P1,), jnp.float32),
        "m2": 0.05 * jnp.arange(P1, dtype=jnp.float32),
        "v2": 1.0 + 0.1 * jnp.arange(P1, dtype=jnp.float32),
    }

    out = basic_block(x, params)
    jax.block_until_ready(out)

    ref = reference_block(x, params)
    assert out.shape == (N, C, H, W)
    assert jnp.max(jnp.abs(out - ref)) < 1e-4

    print("KERNEL_OK")
</pallas_src>

<mosaic_0001>
module attributes {stable_mosaic.version = 11 : i64} {
  func.func @basic_block_kernel(%arg0: i32, %arg1: memref<1x4x16x16xf32, #tpu.memory_space<vmem>>, %arg2: memref<2x4xf32, #tpu.memory_space<smem>>, %arg3: memref<2xf32, #tpu.memory_space<smem>>, %arg4: memref<4x18xf32, #tpu.memory_space<smem>>, %arg5: memref<4xf32, #tpu.memory_space<smem>>, %arg6: memref<1x4x16x16xf32, #tpu.memory_space<vmem>>, %arg7: memref<2x18x18xf32, #tpu.memory_space<vmem>>) attributes {dimension_semantics = [#tpu.dimension_semantics<parallel>], iteration_bounds = array<i64: 2>, scalar_prefetch = 0 : i64, scratch_operands = 1 : i64, tpu.core_type = #tpu.core_type<tc>, window_params = [{transform_indices = @transform_0, window_bounds = array<i64: 1, 4, 16, 16>}, {transform_indices = @transform_1, window_bounds = array<i64: 2, 4>}, {transform_indices = @transform_2, window_bounds = array<i64: 2>}, {transform_indices = @transform_3, window_bounds = array<i64: 4, 18>}, {transform_indices = @transform_4, window_bounds = array<i64: 4>}, {transform_indices = @transform_5, window_bounds = array<i64: 1, 4, 16, 16>}]} {
    %cst = arith.constant 0.000000e+00 : f32
    %0 = vector.broadcast %cst : f32 to vector<2x1x18xf32>
    %cst_0 = arith.constant 0.000000e+00 : f32
    %1 = vector.broadcast %cst_0 : f32 to vector<2x18x1xf32>
    %c0 = arith.constant 0 : index
    %c0_1 = arith.constant 0 : index
    %c0_2 = arith.constant 0 : index
    %2 = vector.load %arg7[%c0, %c0_1, %c0_2] : memref<2x18x18xf32, #tpu.memory_space<vmem>>, vector<2x1x18xf32>
    tpu.vector_store %arg7[%c0, %c0_1, %c0_2], %0 {strides = array<i32>} : memref<2x18x18xf32, #tpu.memory_space<vmem>>, vector<2x1x18xf32>,
    %c0_3 = arith.constant 0 : index
    %c17 = arith.constant 17 : index
    %c0_4 = arith.constant 0 : index
    %3 = vector.load %arg7[%c0_3, %c17, %c0_4] : memref<2x18x18xf32, #tpu.memory_space<vmem>>, vector<2x1x18xf32>
    tpu.vector_store %arg7[%c0_3, %c17, %c0_4], %0 {strides = array<i32>} : memref<2x18x18xf32, #tpu.memory_space<vmem>>, vector<2x1x18xf32>,
    %c0_5 = arith.constant 0 : index
    %c0_6 = arith.constant 0 : index
    %c0_7 = arith.constant 0 : index
    %4 = vector.load %arg7[%c0_5, %c0_6, %c0_7] : memref<2x18x18xf32, #tpu.memory_space<vmem>>, vector<2x18x1xf32>
    tpu.vector_store %arg7[%c0_5, %c0_6, %c0_7], %1 {strides = array<i32>} : memref<2x18x18xf32, #tpu.memory_space<vmem>>, vector<2x18x1xf32>,
    %c0_8 = arith.constant 0 : index
    %c0_9 = arith.constant 0 : index
    %c17_10 = arith.constant 17 : index
    %5 = vector.load %arg7[%c0_8, %c0_9, %c17_10] : memref<2x18x18xf32, #tpu.memory_space<vmem>>, vector<2x18x1xf32>
    tpu.vector_store %arg7[%c0_8, %c0_9, %c17_10], %1 {strides = array<i32>} : memref<2x18x18xf32, #tpu.memory_space<vmem>>, vector<2x18x1xf32>,
    %c0_11 = arith.constant 0 : index
    %c0_12 = arith.constant 0 : index
    %c0_13 = arith.constant 0 : index
    %c0_14 = arith.constant 0 : index
    %6 = vector.load %arg1[%c0_11, %c0_12, %c0_13, %c0_14] : memref<1x4x16x16xf32, #tpu.memory_space<vmem>>, vector<1x1x16x16xf32>
    %7 = vector.shape_cast %6 : vector<1x1x16x16xf32> to vector<16x16xf32>
    %c0_15 = arith.constant 0 : index
    %c1 = arith.constant 1 : index
    %c0_16 = arith.constant 0 : index
    %c0_17 = arith.constant 0 : index
    %8 = vector.load %arg1[%c0_15, %c1, %c0_16, %c0_17] : memref<1x4x16x16xf32, #tpu.memory_space<vmem>>, vector<1x1x16x16xf32>
    %9 = vector.shape_cast %8 : vector<1x1x16x16xf32> to vector<16x16xf32>
    %c0_18 = arith.constant 0 : index
    %c2 = arith.constant 2 : index
    %c0_19 = arith.constant 0 : index
    %c0_20 = arith.constant 0 : index
    %10 = vector.load %arg1[%c0_18, %c2, %c0_19, %c0_20] : memref<1x4x16x16xf32, #tpu.memory_space<vmem>>, vector<1x1x16x16xf32>
    %11 = vector.shape_cast %10 : vector<1x1x16x16xf32> to vector<16x16xf32>
    %c0_21 = arith.constant 0 : index
    %c3 = arith.constant 3 : index
    %c0_22 = arith.constant 0 : index
    %c0_23 = arith.constant 0 : index
    %12 = vector.load %arg1[%c0_21, %c3, %c0_22, %c0_23] : memref<1x4x16x16xf32, #tpu.memory_space<vmem>>, vector<1x1x16x16xf32>
    %13 = vector.shape_cast %12 : vector<1x1x16x16xf32> to vector<16x16xf32>
    %c0_24 = arith.constant 0 : index
    %c0_25 = arith.constant 0 : index
    %14 = memref.load %arg2[%c0_24, %c0_25] : memref<2x4xf32, #tpu.memory_space<smem>>
    %15 = vector.broadcast %14 : f32 to vector<16x16xf32>
    %16 = arith.mulf %15, %7 : vector<16x16xf32>
    %c0_26 = arith.constant 0 : index
    %c1_27 = arith.constant 1 : index
    %17 = memref.load %arg2[%c0_26, %c1_27] : memref<2x4xf32, #tpu.memory_space<smem>>
    %18 = vector.broadcast %17 : f32 to vector<16x16xf32>
    %19 = arith.mulf %18, %9 : vector<16x16xf32>
    %20 = arith.addf %16, %19 : vector<16x16xf32>
    %c0_28 = arith.constant 0 : index
    %c2_29 = arith.constant 2 : index
    %21 = memref.load %arg2[%c0_28, %c2_29] : memref<2x4xf32, #tpu.memory_space<smem>>
    %22 = vector.broadcast %21 : f32 to vector<16x16xf32>
    %23 = arith.mulf %22, %11 : vector<16x16xf32>
    %24 = arith.addf %20, %23 : vector<16x16xf32>
    %c0_30 = arith.constant 0 : index
    %c3_31 = arith.constant 3 : index
    %25 = memref.load %arg2[%c0_30, %c3_31] : memref<2x4xf32, #tpu.memory_space<smem>>
    %26 = vector.broadcast %25 : f32 to vector<16x16xf32>
    %27 = arith.mulf %26, %13 : vector<16x16xf32>
    %28 = arith.addf %24, %27 : vector<16x16xf32>
    %c0_32 = arith.constant 0 : index
    %29 = memref.load %arg3[%c0_32] : memref<2xf32, #tpu.memory_space<smem>>
    %30 = vector.broadcast %29 : f32 to vector<16x16xf32>
    %31 = arith.addf %28, %30 : vector<16x16xf32>
    %cst_33 = arith.constant 1.000000e-01 : f32
    %32 = vector.broadcast %cst_33 : f32 to vector<16x16xf32>
    %33 = arith.mulf %32, %31 : vector<16x16xf32>
    %34 = arith.maximumf %31, %33 : vector<16x16xf32>
    %c0_34 = arith.constant 0 : index
    %c1_35 = arith.constant 1 : index
    %c1_36 = arith.constant 1 : index
    %35 = vector.load %arg7[%c0_34, %c1_35, %c1_36] : memref<2x18x18xf32, #tpu.memory_space<vmem>>, vector<1x16x16xf32>
    %36 = vector.shape_cast %35 : vector<1x16x16xf32> to vector<16x16xf32>
    %37 = vector.shape_cast %34 : vector<16x16xf32> to vector<1x16x16xf32>
    tpu.vector_store %arg7[%c0_34, %c1_35, %c1_36], %37 {strides = array<i32>} : memref<2x18x18xf32, #tpu.memory_space<vmem>>, vector<1x16x16xf32>,
    %c1_37 = arith.constant 1 : index
    %c0_38 = arith.constant 0 : index
    %38 = memref.load %arg2[%c1_37, %c0_38] : memref<2x4xf32, #tpu.memory_space<smem>>
    %39 = vector.broadcast %38 : f32 to vector<16x16xf32>
    %40 = arith.mulf %39, %7 : vector<16x16xf32>
    %c1_39 = arith.constant 1 : index
    %c1_40 = arith.constant 1 : index
    %41 = memref.load %arg2[%c1_39, %c1_40] : memref<2x4xf32, #tpu.memory_space<smem>>
    %42 = vector.broadcast %41 : f32 to vector<16x16xf32>
    %43 = arith.mulf %42, %9 : vector<16x16xf32>
    %44 = arith.addf %40, %43 : vector<16x16xf32>
    %c1_41 = arith.constant 1 : index
    %c2_42 = arith.constant 2 : index
    %45 = memref.load %arg2[%c1_41, %c2_42] : memref<2x4xf32, #tpu.memory_space<smem>>
    %46 = vector.broadcast %45 : f32 to vector<16x16xf32>
    %47 = arith.mulf %46, %11 : vector<16x16xf32>
    %48 = arith.addf %44, %47 : vector<16x16xf32>
    %c1_43 = arith.constant 1 : index
    %c3_44 = arith.constant 3 : index
    %49 = memref.load %arg2[%c1_43, %c3_44] : memref<2x4xf32, #tpu.memory_space<smem>>
    %50 = vector.broadcast %49 : f32 to vector<16x16xf32>
    %51 = arith.mulf %50, %13 : vector<16x16xf32>
    %52 = arith.addf %48, %51 : vector<16x16xf32>
    %c1_45 = arith.constant 1 : index
    %53 = memref.load %arg3[%c1_45] : memref<2xf32, #tpu.memory_space<smem>>
    %54 = vector.broadcast %53 : f32 to vector<16x16xf32>
    %55 = arith.addf %52, %54 : vector<16x16xf32>
    %cst_46 = arith.constant 1.000000e-01 : f32
    %56 = vector.broadcast %cst_46 : f32 to vector<16x16xf32>
    %57 = arith.mulf %56, %55 : vector<16x16xf32>
    %58 = arith.maximumf %55, %57 : vector<16x16xf32>
    %c1_47 = arith.constant 1 : index
    %c1_48 = arith.constant 1 : index
    %c1_49 = arith.constant 1 : index
    %59 = vector.load %arg7[%c1_47, %c1_48, %c1_49] : memref<2x18x18xf32, #tpu.memory_space<vmem>>, vector<1x16x16xf32>
    %60 = vector.shape_cast %59 : vector<1x16x16xf32> to vector<16x16xf32>
    %61 = vector.shape_cast %58 : vector<16x16xf32> to vector<1x16x16xf32>
    tpu.vector_store %arg7[%c1_47, %c1_48, %c1_49], %61 {strides = array<i32>} : memref<2x18x18xf32, #tpu.memory_space<vmem>>, vector<1x16x16xf32>,
    %c0_50 = arith.constant 0 : index
    %c0_51 = arith.constant 0 : index
    %c0_52 = arith.constant 0 : index
    %62 = vector.load %arg7[%c0_50, %c0_51, %c0_52] : memref<2x18x18xf32, #tpu.memory_space<vmem>>, vector<1x16x16xf32>
    %63 = vector.shape_cast %62 : vector<1x16x16xf32> to vector<16x16xf32>
    %c0_53 = arith.constant 0 : index
    %c0_54 = arith.constant 0 : index
    %64 = memref.load %arg4[%c0_53, %c0_54] : memref<4x18xf32, #tpu.memory_space<smem>>
    %65 = vector.broadcast %64 : f32 to vector<16x16xf32>
    %66 = arith.mulf %65, %63 : vector<16x16xf32>
    %c1_55 = arith.constant 1 : index
    %c0_56 = arith.constant 0 : index
    %67 = memref.load %arg4[%c1_55, %c0_56] : memref<4x18xf32, #tpu.memory_space<smem>>
    %68 = vector.broadcast %67 : f32 to vector<16x16xf32>
    %69 = arith.mulf %68, %63 : vector<16x16xf32>
    %c2_57 = arith.constant 2 : index
    %c0_58 = arith.constant 0 : index
    %70 = memref.load %arg4[%c2_57, %c0_58] : memref<4x18xf32, #tpu.memory_space<smem>>
    %71 = vector.broadcast %70 : f32 to vector<16x16xf32>
    %72 = arith.mulf %71, %63 : vector<16x16xf32>
    %c3_59 = arith.constant 3 : index
    %c0_60 = arith.constant 0 : index
    %73 = memref.load %arg4[%c3_59, %c0_60] : memref<4x18xf32, #tpu.memory_space<smem>>
    %74 = vector.broadcast %73 : f32 to vector<16x16xf32>
    %75 = arith.mulf %74, %63 : vector<16x16xf32>
    %c0_61 = arith.constant 0 : index
    %c0_62 = arith.constant 0 : index
    %c1_63 = arith.constant 1 : index
    %76 = vector.load %arg7[%c0_61, %c0_62, %c1_63] : memref<2x18x18xf32, #tpu.memory_space<vmem>>, vector<1x16x16xf32>
    %77 = vector.shape_cast %76 : vector<1x16x16xf32> to vector<16x16xf32>
    %c0_64 = arith.constant 0 : index
    %c1_65 = arith.constant 1 : index
    %78 = memref.load %arg4[%c0_64, %c1_65] : memref<4x18xf32, #tpu.memory_space<smem>>
    %79 = vector.broadcast %78 : f32 to vector<16x16xf32>
    %80 = arith.mulf %79, %77 : vector<16x16xf32>
    %81 = arith.addf %66, %80 : vector<16x16xf32>
    %c1_66 = arith.constant 1 : index
    %c1_67 = arith.constant 1 : index
    %82 = memref.load %arg4[%c1_66, %c1_67] : memref<4x18xf32, #tpu.memory_space<smem>>
    %83 = vector.broadcast %82 : f32 to vector<16x16xf32>
    %84 = arith.mulf %83, %77 : vector<16x16xf32>
    %85 = arith.addf %69, %84 : vector<16x16xf32>
    %c2_68 = arith.constant 2 : index
    %c1_69 = arith.constant 1 : index
    %86 = memref.load %arg4[%c2_68, %c1_69] : memref<4x18xf32, #tpu.memory_space<smem>>
    %87 = vector.broadcast %86 : f32 to vector<16x16xf32>
    %88 = arith.mulf %87, %77 : vector<16x16xf32>
    %89 = arith.addf %72, %88 : vector<16x16xf32>
    %c3_70 = arith.constant 3 : index
    %c1_71 = arith.constant 1 : index
    %90 = memref.load %arg4[%c3_70, %c1_71] : memref<4x18xf32, #tpu.memory_space<smem>>
    %91 = vector.broadcast %90 : f32 to vector<16x16xf32>
    %92 = arith.mulf %91, %77 : vector<16x16xf32>
    %93 = arith.addf %75, %92 : vector<16x16xf32>
    %c0_72 = arith.constant 0 : index
    %c0_73 = arith.constant 0 : index
    %c2_74 = arith.constant 2 : index
    %94 = vector.load %arg7[%c0_72, %c0_73, %c2_74] : memref<2x18x18xf32, #tpu.memory_space<vmem>>, vector<1x16x16xf32>
    %95 = vector.shape_cast %94 : vector<1x16x16xf32> to vector<16x16xf32>
    %c0_75 = arith.constant 0 : index
    %c2_76 = arith.constant 2 : index
    %96 = memref.load %arg4[%c0_75, %c2_76] : memref<4x18xf32, #tpu.memory_space<smem>>
    %97 = vector.broadcast %96 : f32 to vector<16x16xf32>
    %98 = arith.mulf %97, %95 : vector<16x16xf32>
    %99 = arith.addf %81, %98 : vector<16x16xf32>
    %c1_77 = arith.constant 1 : index
    %c2_78 = arith.constant 2 : index
    %100 = memref.load %arg4[%c1_77, %c2_78] : memref<4x18xf32, #tpu.memory_space<smem>>
    %101 = vector.broadcast %100 : f32 to vector<16x16xf32>
    %102 = arith.mulf %101, %95 : vector<16x16xf32>
    %103 = arith.addf %85, %102 : vector<16x16xf32>
    %c2_79 = arith.constant 2 : index
    %c2_80 = arith.constant 2 : index
    %104 = memref.load %arg4[%c2_79, %c2_80] : memref<4x18xf32, #tpu.memory_space<smem>>
    %105 = vector.broadcast %104 : f32 to vector<16x16xf32>
    %106 = arith.mulf %105, %95 : vector<16x16xf32>
    %107 = arith.addf %89, %106 : vector<16x16xf32>
    %c3_81 = arith.constant 3 : index
    %c2_82 = arith.constant 2 : index
    %108 = memref.load %arg4[%c3_81, %c2_82] : memref<4x18xf32, #tpu.memory_space<smem>>
    %109 = vector.broadcast %108 : f32 to vector<16x16xf32>
    %110 = arith.mulf %109, %95 : vector<16x16xf32>
    %111 = arith.addf %93, %110 : vector<16x16xf32>
    %c0_83 = arith.constant 0 : index
    %c1_84 = arith.constant 1 : index
    %c0_85 = arith.constant 0 : index
    %112 = vector.load %arg7[%c0_83, %c1_84, %c0_85] : memref<2x18x18xf32, #tpu.memory_space<vmem>>, vector<1x16x16xf32>
    %113 = vector.shape_cast %112 : vector<1x16x16xf32> to vector<16x16xf32>
    %c0_86 = arith.constant 0 : index
    %c3_87 = arith.constant 3 : index
    %114 = memref.load %arg4[%c0_86, %c3_87] : memref<4x18xf32, #tpu.memory_space<smem>>
    %115 = vector.broadcast %114 : f32 to vector<16x16xf32>
    %116 = arith.mulf %115, %113 : vector<16x16xf32>
    %117 = arith.addf %99, %116 : vector<16x16xf32>
    %c1_88 = arith.constant 1 : index
    %c3_89 = arith.constant 3 : index
    %118 = memref.load %arg4[%c1_88, %c3_89] : memref<4x18xf32, #tpu.memory_space<smem>>
    %119 = vector.broadcast %118 : f32 to vector<16x16xf32>
    %120 = arith.mulf %119, %113 : vector<16x16xf32>
    %121 = arith.addf %103, %120 : vector<16x16xf32>
    %c2_90 = arith.constant 2 : index
    %c3_91 = arith.constant 3 : index
    %122 = memref.load %arg4[%c2_90, %c3_91] : memref<4x18xf32, #tpu.memory_space<smem>>
    %123 = vector.broadcast %122 : f32 to vector<16x16xf32>
    %124 = arith.mulf %123, %113 : vector<16x16xf32>
    %125 = arith.addf %107, %124 : vector<16x16xf32>
    %c3_92 = arith.constant 3 : index
    %c3_93 = arith.constant 3 : index
    %126 = memref.load %arg4[%c3_92, %c3_93] : memref<4x18xf32, #tpu.memory_space<smem>>
    %127 = vector.broadcast %126 : f32 to vector<16x16xf32>
    %128 = arith.mulf %127, %113 : vector<16x16xf32>
    %129 = arith.addf %111, %128 : vector<16x16xf32>
    %c0_94 = arith.constant 0 : index
    %c1_95 = arith.constant 1 : index
    %c1_96 = arith.constant 1 : index
    %130 = vector.load %arg7[%c0_94, %c1_95, %c1_96] : memref<2x18x18xf32, #tpu.memory_space<vmem>>, vector<1x16x16xf32>
    %131 = vector.shape_cast %130 : vector<1x16x16xf32> to vector<16x16xf32>
    %c0_97 = arith.constant 0 : index
    %c4 = arith.constant 4 : index
    %132 = memref.load %arg4[%c0_97, %c4] : memref<4x18xf32, #tpu.memory_space<smem>>
    %133 = vector.broadcast %132 : f32 to vector<16x16xf32>
    %134 = arith.mulf %133, %131 : vector<16x16xf32>
    %135 = arith.addf %117, %134 : vector<16x16xf32>
    %c1_98 = arith.constant 1 : index
    %c4_99 = arith.constant 4 : index
    %136 = memref.load %arg4[%c1_98, %c4_99] : memref<4x18xf32, #tpu.memory_space<smem>>
    %137 = vector.broadcast %136 : f32 to vector<16x16xf32>
    %138 = arith.mulf %137, %131 : vector<16x16xf32>
    %139 = arith.addf %121, %138 : vector<16x16xf32>
    %c2_100 = arith.constant 2 : index
    %c4_101 = arith.constant 4 : index
    %140 = memref.load %arg4[%c2_100, %c4_101] : memref<4x18xf32, #tpu.memory_space<smem>>
    %141 = vector.broadcast %140 : f32 to vector<16x16xf32>
    %142 = arith.mulf %141, %131 : vector<16x16xf32>
    %143 = arith.addf %125, %142 : vector<16x16xf32>
    %c3_102 = arith.constant 3 : index
    %c4_103 = arith.constant 4 : index
    %144 = memref.load %arg4[%c3_102, %c4_103] : memref<4x18xf32, #tpu.memory_space<smem>>
    %145 = vector.broadcast %144 : f32 to vector<16x16xf32>
    %146 = arith.mulf %145, %131 : vector<16x16xf32>
    %147 = arith.addf %129, %146 : vector<16x16xf32>
    %c0_104 = arith.constant 0 : index
    %c1_105 = arith.constant 1 : index
    %c2_106 = arith.constant 2 : index
    %148 = vector.load %arg7[%c0_104, %c1_105, %c2_106] : memref<2x18x18xf32, #tpu.memory_space<vmem>>, vector<1x16x16xf32>
    %149 = vector.shape_cast %148 : vector<1x16x16xf32> to vector<16x16xf32>
    %c0_107 = arith.constant 0 : index
    %c5 = arith.constant 5 : index
    %150 = memref.load %arg4[%c0_107, %c5] : memref<4x18xf32, #tpu.memory_space<smem>>
    %151 = vector.broadcast %150 : f32 to vector<16x16xf32>
    %152 = arith.mulf %151, %149 : vector<16x16xf32>
    %153 = arith.addf %135, %152 : vector<16x16xf32>
    %c1_108 = arith.constant 1 : index
    %c5_109 = arith.constant 5 : index
    %154 = memref.load %arg4[%c1_108, %c5_109] : memref<4x18xf32, #tpu.memory_space<smem>>
    %155 = vector.broadcast %154 : f32 to vector<16x16xf32>
    %156 = arith.mulf %155, %149 : vector<16x16xf32>
    %157 = arith.addf %139, %156 : vector<16x16xf32>
    %c2_110 = arith.constant 2 : index
    %c5_111 = arith.constant 5 : index
    %158 = memref.load %arg4[%c2_110, %c5_111] : memref<4x18xf32, #tpu.memory_space<smem>>
    %159 = vector.broadcast %158 : f32 to vector<16x16xf32>
    %160 = arith.mulf %159, %149 : vector<16x16xf32>
    %161 = arith.addf %143, %160 : vector<16x16xf32>
    %c3_112 = arith.constant 3 : index
    %c5_113 = arith.constant 5 : index
    %162 = memref.load %arg4[%c3_112, %c5_113] : memref<4x18xf32, #tpu.memory_space<smem>>
    %163 = vector.broadcast %162 : f32 to vector<16x16xf32>
    %164 = arith.mulf %163, %149 : vector<16x16xf32>
    %165 = arith.addf %147, %164 : vector<16x16xf32>
    %c0_114 = arith.constant 0 : index
    %c2_115 = arith.constant 2 : index
    %c0_116 = arith.constant 0 : index
    %166 = vector.load %arg7[%c0_114, %c2_115, %c0_116] : memref<2x18x18xf32, #tpu.memory_space<vmem>>, vector<1x16x16xf32>
    %167 = vector.shape_cast %166 : vector<1x16x16xf32> to vector<16x16xf32>
    %c0_117 = arith.constant 0 : index
    %c6 = arith.constant 6 : index
    %168 = memref.load %arg4[%c0_117, %c6] : memref<4x18xf32, #tpu.memory_space<smem>>
    %169 = vector.broadcast %168 : f32 to vector<16x16xf32>
    %170 = arith.mulf %169, %167 : vector<16x16xf32>
    %171 = arith.addf %153, %170 : vector<16x16xf32>
    %c1_118 = arith.constant 1 : index
    %c6_119 = arith.constant 6 : index
    %172 = memref.load %arg4[%c1_118, %c6_119] : memref<4x18xf32, #tpu.memory_space<smem>>
    %173 = vector.broadcast %172 : f32 to vector<16x16xf32>
    %174 = arith.mulf %173, %167 : vector<16x16xf32>
    %175 = arith.addf %157, %174 : vector<16x16xf32>
    %c2_120 = arith.constant 2 : index
    %c6_121 = arith.constant 6 : index
    %176 = memref.load %arg4[%c2_120, %c6_121] : memref<4x18xf32, #tpu.memory_space<smem>>
    %177 = vector.broadcast %176 : f32 to vector<16x16xf32>
    %178 = arith.mulf %177, %167 : vector<16x16xf32>
    %179 = arith.addf %161, %178 : vector<16x16xf32>
    %c3_122 = arith.constant 3 : index
    %c6_123 = arith.constant 6 : index
    %180 = memref.load %arg4[%c3_122, %c6_123] : memref<4x18xf32, #tpu.memory_space<smem>>
    %181 = vector.broadcast %180 : f32 to vector<16x16xf32>
    %182 = arith.mulf %181, %167 : vector<16x16xf32>
    %183 = arith.addf %165, %182 : vector<16x16xf32>
    %c0_124 = arith.constant 0 : index
    %c2_125 = arith.constant 2 : index
    %c1_126 = arith.constant 1 : index
    %184 = vector.load %arg7[%c0_124, %c2_125, %c1_126] : memref<2x18x18xf32, #tpu.memory_space<vmem>>, vector<1x16x16xf32>
    %185 = vector.shape_cast %184 : vector<1x16x16xf32> to vector<16x16xf32>
    %c0_127 = arith.constant 0 : index
    %c7 = arith.constant 7 : index
    %186 = memref.load %arg4[%c0_127, %c7] : memref<4x18xf32, #tpu.memory_space<smem>>
    %187 = vector.broadcast %186 : f32 to vector<16x16xf32>
    %188 = arith.mulf %187, %185 : vector<16x16xf32>
    %189 = arith.addf %171, %188 : vector<16x16xf32>
    %c1_128 = arith.constant 1 : index
    %c7_129 = arith.constant 7 : index
    %190 = memref.load %arg4[%c1_128, %c7_129] : memref<4x18xf32, #tpu.memory_space<smem>>
    %191 = vector.broadcast %190 : f32 to vector<16x16xf32>
    %192 = arith.mulf %191, %185 : vector<16x16xf32>
    %193 = arith.addf %175, %192 : vector<16x16xf32>
    %c2_130 = arith.constant 2 : index
    %c7_131 = arith.constant 7 : index
    %194 = memref.load %arg4[%c2_130, %c7_131] : memref<4x18xf32, #tpu.memory_space<smem>>
    %195 = vector.broadcast %194 : f32 to vector<16x16xf32>
    %196 = arith.mulf %195, %185 : vector<16x16xf32>
    %197 = arith.addf %179, %196 : vector<16x16xf32>
    %c3_132 = arith.constant 3 : index
    %c7_133 = arith.constant 7 : index
    %198 = memref.load %arg4[%c3_132, %c7_133] : memref<4x18xf32, #tpu.memory_space<smem>>
    %199 = vector.broadcast %198 : f32 to vector<16x16xf32>
    %200 = arith.mulf %199, %185 : vector<16x16xf32>
    %201 = arith.addf %183, %200 : vector<16x16xf32>
    %c0_134 = arith.constant 0 : index
    %c2_135 = arith.constant 2 : index
    %c2_136 = arith.constant 2 : index
    %202 = vector.load %arg7[%c0_134, %c2_135, %c2_136] : memref<2x18x18xf32, #tpu.memory_space<vmem>>, vector<1x16x16xf32>
    %203 = vector.shape_cast %202 : vector<1x16x16xf32> to vector<16x16xf32>
    %c0_137 = arith.constant 0 : index
    %c8 = arith.constant 8 : index
    %204 = memref.load %arg4[%c0_137, %c8] : memref<4x18xf32, #tpu.memory_space<smem>>
    %205 = vector.broadcast %204 : f32 to vector<16x16xf32>
    %206 = arith.mulf %205, %203 : vector<16x16xf32>
    %207 = arith.addf %189, %206 : vector<16x16xf32>
    %c1_138 = arith.constant 1 : index
    %c8_139 = arith.constant 8 : index
    %208 = memref.load %arg4[%c1_138, %c8_139] : memref<4x18xf32, #tpu.memory_space<smem>>
    %209 = vector.broadcast %208 : f32 to vector<16x16xf32>
    %210 = arith.mulf %209, %203 : vector<16x16xf32>
    %211 = arith.addf %193, %210 : vector<16x16xf32>
    %c2_140 = arith.constant 2 : index
    %c8_141 = arith.constant 8 : index
    %212 = memref.load %arg4[%c2_140, %c8_141] : memref<4x18xf32, #tpu.memory_space<smem>>
    %213 = vector.broadcast %212 : f32 to vector<16x16xf32>
    %214 = arith.mulf %213, %203 : vector<16x16xf32>
    %215 = arith.addf %197, %214 : vector<16x16xf32>
    %c3_142 = arith.constant 3 : index
    %c8_143 = arith.constant 8 : index
    %216 = memref.load %arg4[%c3_142, %c8_143] : memref<4x18xf32, #tpu.memory_space<smem>>
    %217 = vector.broadcast %216 : f32 to vector<16x16xf32>
    %218 = arith.mulf %217, %203 : vector<16x16xf32>
    %219 = arith.addf %201, %218 : vector<16x16xf32>
    %c1_144 = arith.constant 1 : index
    %c0_145 = arith.constant 0 : index
    %c0_146 = arith.constant 0 : index
    %220 = vector.load %arg7[%c1_144, %c0_145, %c0_146] : memref<2x18x18xf32, #tpu.memory_space<vmem>>, vector<1x16x16xf32>
    %221 = vector.shape_cast %220 : vector<1x16x16xf32> to vector<16x16xf32>
    %c0_147 = arith.constant 0 : index
    %c9 = arith.constant 9 : index
    %222 = memref.load %arg4[%c0_147, %c9] : memref<4x18xf32, #tpu.memory_space<smem>>
    %223 = vector.broadcast %222 : f32 to vector<16x16xf32>
    %224 = arith.mulf %223, %221 : vector<16x16xf32>
    %225 = arith.addf %207, %224 : vector<16x16xf32>
    %c1_148 = arith.constant 1 : index
    %c9_149 = arith.constant 9 : index
    %226 = memref.load %arg4[%c1_148, %c9_149] : memref<4x18xf32, #tpu.memory_space<smem>>
    %227 = vector.broadcast %226 : f32 to vector<16x16xf32>
    %228 = arith.mulf %227, %221 : vector<16x16xf32>
    %229 = arith.addf %211, %228 : vector<16x16xf32>
    %c2_150 = arith.constant 2 : index
    %c9_151 = arith.constant 9 : index
    %230 = memref.load %arg4[%c2_150, %c9_151] : memref<4x18xf32, #tpu.memory_space<smem>>
    %231 = vector.broadcast %230 : f32 to vector<16x16xf32>
    %232 = arith.mulf %231, %221 : vector<16x16xf32>
    %233 = arith.addf %215, %232 : vector<16x16xf32>
    %c3_152 = arith.constant 3 : index
    %c9_153 = arith.constant 9 : index
    %234 = memref.load %arg4[%c3_152, %c9_153] : memref<4x18xf32, #tpu.memory_space<smem>>
    %235 = vector.broadcast %234 : f32 to vector<16x16xf32>
    %236 = arith.mulf %235, %221 : vector<16x16xf32>
    %237 = arith.addf %219, %236 : vector<16x16xf32>
    %c1_154 = arith.constant 1 : index
    %c0_155 = arith.constant 0 : index
    %c1_156 = arith.constant 1 : index
    %238 = vector.load %arg7[%c1_154, %c0_155, %c1_156] : memref<2x18x18xf32, #tpu.memory_space<vmem>>, vector<1x16x16xf32>
    %239 = vector.shape_cast %238 : vector<1x16x16xf32> to vector<16x16xf32>
    %c0_157 = arith.constant 0 : index
    %c10 = arith.constant 10 : index
    %240 = memref.load %arg4[%c0_157, %c10] : memref<4x18xf32, #tpu.memory_space<smem>>
    %241 = vector.broadcast %240 : f32 to vector<16x16xf32>
    %242 = arith.mulf %241, %239 : vector<16x16xf32>
    %243 = arith.addf %225, %242 : vector<16x16xf32>
    %c1_158 = arith.constant 1 : index
    %c10_159 = arith.constant 10 : index
    %244 = memref.load %arg4[%c1_158, %c10_159] : memref<4x18xf32, #tpu.memory_space<smem>>
    %245 = vector.broadcast %244 : f32 to vector<16x16xf32>
    %246 = arith.mulf %245, %239 : vector<16x16xf32>
    %247 = arith.addf %229, %246 : vector<16x16xf32>
    %c2_160 = arith.constant 2 : index
    %c10_161 = arith.constant 10 : index
    %248 = memref.load %arg4[%c2_160, %c10_161] : memref<4x18xf32, #tpu.memory_space<smem>>
    %249 = vector.broadcast %248 : f32 to vector<16x16xf32>
    %250 = arith.mulf %249, %239 : vector<16x16xf32>
    %251 = arith.addf %233, %250 : vector<16x16xf32>
    %c3_162 = arith.constant 3 : index
    %c10_163 = arith.constant 10 : index
    %252 = memref.load %arg4[%c3_162, %c10_163] : memref<4x18xf32, #tpu.memory_space<smem>>
    %253 = vector.broadcast %252 : f32 to vector<16x16xf32>
    %254 = arith.mulf %253, %239 : vector<16x16xf32>
    %255 = arith.addf %237, %254 : vector<16x16xf32>
    %c1_164 = arith.constant 1 : index
    %c0_165 = arith.constant 0 : index
    %c2_166 = arith.constant 2 : index
    %256 = vector.load %arg7[%c1_164, %c0_165, %c2_166] : memref<2x18x18xf32, #tpu.memory_space<vmem>>, vector<1x16x16xf32>
    %257 = vector.shape_cast %256 : vector<1x16x16xf32> to vector<16x16xf32>
    %c0_167 = arith.constant 0 : index
    %c11 = arith.constant 11 : index
    %258 = memref.load %arg4[%c0_167, %c11] : memref<4x18xf32, #tpu.memory_space<smem>>
    %259 = vector.broadcast %258 : f32 to vector<16x16xf32>
    %260 = arith.mulf %259, %257 : vector<16x16xf32>
    %261 = arith.addf %243, %260 : vector<16x16xf32>
    %c1_168 = arith.constant 1 : index
    %c11_169 = arith.constant 11 : index
    %262 = memref.load %arg4[%c1_168, %c11_169] : memref<4x18xf32, #tpu.memory_space<smem>>
    %263 = vector.broadcast %262 : f32 to vector<16x16xf32>
    %264 = arith.mulf %263, %257 : vector<16x16xf32>
    %265 = arith.addf %247, %264 : vector<16x16xf32>
    %c2_170 = arith.constant 2 : index
    %c11_171 = arith.constant 11 : index
    %266 = memref.load %arg4[%c2_170, %c11_171] : memref<4x18xf32, #tpu.memory_space<smem>>
    %267 = vector.broadcast %266 : f32 to vector<16x16xf32>
    %268 = arith.mulf %267, %257 : vector<16x16xf32>
    %269 = arith.addf %251, %268 : vector<16x16xf32>
    %c3_172 = arith.constant 3 : index
    %c11_173 = arith.constant 11 : index
    %270 = memref.load %arg4[%c3_172, %c11_173] : memref<4x18xf32, #tpu.memory_space<smem>>
    %271 = vector.broadcast %270 : f32 to vector<16x16xf32>
    %272 = arith.mulf %271, %257 : vector<16x16xf32>
    %273 = arith.addf %255, %272 : vector<16x16xf32>
    %c1_174 = arith.constant 1 : index
    %c1_175 = arith.constant 1 : index
    %c0_176 = arith.constant 0 : index
    %274 = vector.load %arg7[%c1_174, %c1_175, %c0_176] : memref<2x18x18xf32, #tpu.memory_space<vmem>>, vector<1x16x16xf32>
    %275 = vector.shape_cast %274 : vector<1x16x16xf32> to vector<16x16xf32>
    %c0_177 = arith.constant 0 : index
    %c12 = arith.constant 12 : index
    %276 = memref.load %arg4[%c0_177, %c12] : memref<4x18xf32, #tpu.memory_space<smem>>
    %277 = vector.broadcast %276 : f32 to vector<16x16xf32>
    %278 = arith.mulf %277, %275 : vector<16x16xf32>
    %279 = arith.addf %261, %278 : vector<16x16xf32>
    %c1_178 = arith.constant 1 : index
    %c12_179 = arith.constant 12 : index
    %280 = memref.load %arg4[%c1_178, %c12_179] : memref<4x18xf32, #tpu.memory_space<smem>>
    %281 = vector.broadcast %280 : f32 to vector<16x16xf32>
    %282 = arith.mulf %281, %275 : vector<16x16xf32>
    %283 = arith.addf %265, %282 : vector<16x16xf32>
    %c2_180 = arith.constant 2 : index
    %c12_181 = arith.constant 12 : index
    %284 = memref.load %arg4[%c2_180, %c12_181] : memref<4x18xf32, #tpu.memory_space<smem>>
    %285 = vector.broadcast %284 : f32 to vector<16x16xf32>
    %286 = arith.mulf %285, %275 : vector<16x16xf32>
    %287 = arith.addf %269, %286 : vector<16x16xf32>
    %c3_182 = arith.constant 3 : index
    %c12_183 = arith.constant 12 : index
    %288 = memref.load %arg4[%c3_182, %c12_183] : memref<4x18xf32, #tpu.memory_space<smem>>
    %289 = vector.broadcast %288 : f32 to vector<16x16xf32>
    %290 = arith.mulf %289, %275 : vector<16x16xf32>
    %291 = arith.addf %273, %290 : vector<16x16xf32>
    %c1_184 = arith.constant 1 : index
    %c1_185 = arith.constant 1 : index
    %c1_186 = arith.constant 1 : index
    %292 = vector.load %arg7[%c1_184, %c1_185, %c1_186] : memref<2x18x18xf32, #tpu.memory_space<vmem>>, vector<1x16x16xf32>
    %293 = vector.shape_cast %292 : vector<1x16x16xf32> to vector<16x16xf32>
    %c0_187 = arith.constant 0 : index
    %c13 = arith.constant 13 : index
    %294 = memref.load %arg4[%c0_187, %c13] : memref<4x18xf32, #tpu.memory_space<smem>>
    %295 = vector.broadcast %294 : f32 to vector<16x16xf32>
    %296 = arith.mulf %295, %293 : vector<16x16xf32>
    %297 = arith.addf %279, %296 : vector<16x16xf32>
    %c1_188 = arith.constant 1 : index
    %c13_189 = arith.constant 13 : index
    %298 = memref.load %arg4[%c1_188, %c13_189] : memref<4x18xf32, #tpu.memory_space<smem>>
    %299 = vector.broadcast %298 : f32 to vector<16x16xf32>
    %300 = arith.mulf %299, %293 : vector<16x16xf32>
    %301 = arith.addf %283, %300 : vector<16x16xf32>
    %c2_190 = arith.constant 2 : index
    %c13_191 = arith.constant 13 : index
    %302 = memref.load %arg4[%c2_190, %c13_191] : memref<4x18xf32, #tpu.memory_space<smem>>
    %303 = vector.broadcast %302 : f32 to vector<16x16xf32>
    %304 = arith.mulf %303, %293 : vector<16x16xf32>
    %305 = arith.addf %287, %304 : vector<16x16xf32>
    %c3_192 = arith.constant 3 : index
    %c13_193 = arith.constant 13 : index
    %306 = memref.load %arg4[%c3_192, %c13_193] : memref<4x18xf32, #tpu.memory_space<smem>>
    %307 = vector.broadcast %306 : f32 to vector<16x16xf32>
    %308 = arith.mulf %307, %293 : vector<16x16xf32>
    %309 = arith.addf %291, %308 : vector<16x16xf32>
    %c1_194 = arith.constant 1 : index
    %c1_195 = arith.constant 1 : index
    %c2_196 = arith.constant 2 : index
    %310 = vector.load %arg7[%c1_194, %c1_195, %c2_196] : memref<2x18x18xf32, #tpu.memory_space<vmem>>, vector<1x16x16xf32>
    %311 = vector.shape_cast %310 : vector<1x16x16xf32> to vector<16x16xf32>
    %c0_197 = arith.constant 0 : index
    %c14 = arith.constant 14 : index
    %312 = memref.load %arg4[%c0_197, %c14] : memref<4x18xf32, #tpu.memory_space<smem>>
    %313 = vector.broadcast %312 : f32 to vector<16x16xf32>
    %314 = arith.mulf %313, %311 : vector<16x16xf32>
    %315 = arith.addf %297, %314 : vector<16x16xf32>
    %c1_198 = arith.constant 1 : index
    %c14_199 = arith.constant 14 : index
    %316 = memref.load %arg4[%c1_198, %c14_199] : memref<4x18xf32, #tpu.memory_space<smem>>
    %317 = vector.broadcast %316 : f32 to vector<16x16xf32>
    %318 = arith.mulf %317, %311 : vector<16x16xf32>
    %319 = arith.addf %301, %318 : vector<16x16xf32>
    %c2_200 = arith.constant 2 : index
    %c14_201 = arith.constant 14 : index
    %320 = memref.load %arg4[%c2_200, %c14_201] : memref<4x18xf32, #tpu.memory_space<smem>>
    %321 = vector.broadcast %320 : f32 to vector<16x16xf32>
    %322 = arith.mulf %321, %311 : vector<16x16xf32>
    %323 = arith.addf %305, %322 : vector<16x16xf32>
    %c3_202 = arith.constant 3 : index
    %c14_203 = arith.constant 14 : index
    %324 = memref.load %arg4[%c3_202, %c14_203] : memref<4x18xf32, #tpu.memory_space<smem>>
    %325 = vector.broadcast %324 : f32 to vector<16x16xf32>
    %326 = arith.mulf %325, %311 : vector<16x16xf32>
    %327 = arith.addf %309, %326 : vector<16x16xf32>
    %c1_204 = arith.constant 1 : index
    %c2_205 = arith.constant 2 : index
    %c0_206 = arith.constant 0 : index
    %328 = vector.load %arg7[%c1_204, %c2_205, %c0_206] : memref<2x18x18xf32, #tpu.memory_space<vmem>>, vector<1x16x16xf32>
    %329 = vector.shape_cast %328 : vector<1x16x16xf32> to vector<16x16xf32>
    %c0_207 = arith.constant 0 : index
    %c15 = arith.constant 15 : index
    %330 = memref.load %arg4[%c0_207, %c15] : memref<4x18xf32, #tpu.memory_space<smem>>
    %331 = vector.broadcast %330 : f32 to vector<16x16xf32>
    %332 = arith.mulf %331, %329 : vector<16x16xf32>
    %333 = arith.addf %315, %332 : vector<16x16xf32>
    %c1_208 = arith.constant 1 : index
    %c15_209 = arith.constant 15 : index
    %334 = memref.load %arg4[%c1_208, %c15_209] : memref<4x18xf32, #tpu.memory_space<smem>>
    %335 = vector.broadcast %334 : f32 to vector<16x16xf32>
    %336 = arith.mulf %335, %329 : vector<16x16xf32>
    %337 = arith.addf %319, %336 : vector<16x16xf32>
    %c2_210 = arith.constant 2 : index
    %c15_211 = arith.constant 15 : index
    %338 = memref.load %arg4[%c2_210, %c15_211] : memref<4x18xf32, #tpu.memory_space<smem>>
    %339 = vector.broadcast %338 : f32 to vector<16x16xf32>
    %340 = arith.mulf %339, %329 : vector<16x16xf32>
    %341 = arith.addf %323, %340 : vector<16x16xf32>
    %c3_212 = arith.constant 3 : index
    %c15_213 = arith.constant 15 : index
    %342 = memref.load %arg4[%c3_212, %c15_213] : memref<4x18xf32, #tpu.memory_space<smem>>
    %343 = vector.broadcast %342 : f32 to vector<16x16xf32>
    %344 = arith.mulf %343, %329 : vector<16x16xf32>
    %345 = arith.addf %327, %344 : vector<16x16xf32>
    %c1_214 = arith.constant 1 : index
    %c2_215 = arith.constant 2 : index
    %c1_216 = arith.constant 1 : index
    %346 = vector.load %arg7[%c1_214, %c2_215, %c1_216] : memref<2x18x18xf32, #tpu.memory_space<vmem>>, vector<1x16x16xf32>
    %347 = vector.shape_cast %346 : vector<1x16x16xf32> to vector<16x16xf32>
    %c0_217 = arith.constant 0 : index
    %c16 = arith.constant 16 : index
    %348 = memref.load %arg4[%c0_217, %c16] : memref<4x18xf32, #tpu.memory_space<smem>>
    %349 = vector.broadcast %348 : f32 to vector<16x16xf32>
    %350 = arith.mulf %349, %347 : vector<16x16xf32>
    %351 = arith.addf %333, %350 : vector<16x16xf32>
    %c1_218 = arith.constant 1 : index
    %c16_219 = arith.constant 16 : index
    %352 = memref.load %arg4[%c1_218, %c16_219] : memref<4x18xf32, #tpu.memory_space<smem>>
    %353 = vector.broadcast %352 : f32 to vector<16x16xf32>
    %354 = arith.mulf %353, %347 : vector<16x16xf32>
    %355 = arith.addf %337, %354 : vector<16x16xf32>
    %c2_220 = arith.constant 2 : index
    %c16_221 = arith.constant 16 : index
    %356 = memref.load %arg4[%c2_220, %c16_221] : memref<4x18xf32, #tpu.memory_space<smem>>
    %357 = vector.broadcast %356 : f32 to vector<16x16xf32>
    %358 = arith.mulf %357, %347 : vector<16x16xf32>
    %359 = arith.addf %341, %358 : vector<16x16xf32>
    %c3_222 = arith.constant 3 : index
    %c16_223 = arith.constant 16 : index
    %360 = memref.load %arg4[%c3_222, %c16_223] : memref<4x18xf32, #tpu.memory_space<smem>>
    %361 = vector.broadcast %360 : f32 to vector<16x16xf32>
    %362 = arith.mulf %361, %347 : vector<16x16xf32>
    %363 = arith.addf %345, %362 : vector<16x16xf32>
    %c1_224 = arith.constant 1 : index
    %c2_225 = arith.constant 2 : index
    %c2_226 = arith.constant 2 : index
    %364 = vector.load %arg7[%c1_224, %c2_225, %c2_226] : memref<2x18x18xf32, #tpu.memory_space<vmem>>, vector<1x16x16xf32>
    %365 = vector.shape_cast %364 : vector<1x16x16xf32> to vector<16x16xf32>
    %c0_227 = arith.constant 0 : index
    %c17_228 = arith.constant 17 : index
    %366 = memref.load %arg4[%c0_227, %c17_228] : memref<4x18xf32, #tpu.memory_space<smem>>
    %367 = vector.broadcast %366 : f32 to vector<16x16xf32>
    %368 = arith.mulf %367, %365 : vector<16x16xf32>
    %369 = arith.addf %351, %368 : vector<16x16xf32>
    %c1_229 = arith.constant 1 : index
    %c17_230 = arith.constant 17 : index
    %370 = memref.load %arg4[%c1_229, %c17_230] : memref<4x18xf32, #tpu.memory_space<smem>>
    %371 = vector.broadcast %370 : f32 to vector<16x16xf32>
    %372 = arith.mulf %371, %365 : vector<16x16xf32>
    %373 = arith.addf %355, %372 : vector<16x16xf32>
    %c2_231 = arith.constant 2 : index
    %c17_232 = arith.constant 17 : index
    %374 = memref.load %arg4[%c2_231, %c17_232] : memref<4x18xf32, #tpu.memory_space<smem>>
    %375 = vector.broadcast %374 : f32 to vector<16x16xf32>
    %376 = arith.mulf %375, %365 : vector<16x16xf32>
    %377 = arith.addf %359, %376 : vector<16x16xf32>
    %c3_233 = arith.constant 3 : index
    %c17_234 = arith.constant 17 : index
    %378 = memref.load %arg4[%c3_233, %c17_234] : memref<4x18xf32, #tpu.memory_space<smem>>
    %379 = vector.broadcast %378 : f32 to vector<16x16xf32>
    %380 = arith.mulf %379, %365 : vector<16x16xf32>
    %381 = arith.addf %363, %380 : vector<16x16xf32>
    %c0_235 = arith.constant 0 : index
    %382 = memref.load %arg5[%c0_235] : memref<4xf32, #tpu.memory_space<smem>>
    %383 = vector.broadcast %382 : f32 to vector<16x16xf32>
    %384 = arith.addf %369, %383 : vector<16x16xf32>
    %cst_236 = arith.constant 1.000000e-01 : f32
    %385 = vector.broadcast %cst_236 : f32 to vector<16x16xf32>
    %386 = arith.mulf %385, %384 : vector<16x16xf32>
    %387 = arith.maximumf %384, %386 : vector<16x16xf32>
    %388 = arith.addf %387, %7 : vector<16x16xf32>
    %c0_237 = arith.constant 0 : index
    %c0_238 = arith.constant 0 : index
    %c0_239 = arith.constant 0 : index
    %c0_240 = arith.constant 0 : index
    %389 = vector.load %arg6[%c0_237, %c0_238, %c0_239, %c0_240] : memref<1x4x16x16xf32, #tpu.memory_space<vmem>>, vector<1x1x16x16xf32>
    %390 = vector.shape_cast %389 : vector<1x1x16x16xf32> to vector<16x16xf32>
    %391 = vector.shape_cast %388 : vector<16x16xf32> to vector<1x1x16x16xf32>
    tpu.vector_store %arg6[%c0_237, %c0_238, %c0_239, %c0_240], %391 {strides = array<i32>} : memref<1x4x16x16xf32, #tpu.memory_space<vmem>>, vector<1x1x16x16xf32>,
    %c1_241 = arith.constant 1 : index
    %392 = memref.load %arg5[%c1_241] : memref<4xf32, #tpu.memory_space<smem>>
    %393 = vector.broadcast %392 : f32 to vector<16x16xf32>
    %394 = arith.addf %373, %393 : vector<16x16xf32>
    %cst_242 = arith.constant 1.000000e-01 : f32
    %395 = vector.broadcast %cst_242 : f32 to vector<16x16xf32>
    %396 = arith.mulf %395, %394 : vector<16x16xf32>
    %397 = arith.maximumf %394, %396 : vector<16x16xf32>
    %398 = arith.addf %397, %9 : vector<16x16xf32>
    %c0_243 = arith.constant 0 : index
    %c1_244 = arith.constant 1 : index
    %c0_245 = arith.constant 0 : index
    %c0_246 = arith.constant 0 : index
    %399 = vector.load %arg6[%c0_243, %c1_244, %c0_245, %c0_246] : memref<1x4x16x16xf32, #tpu.memory_space<vmem>>, vector<1x1x16x16xf32>
    %400 = vector.shape_cast %399 : vector<1x1x16x16xf32> to vector<16x16xf32>
    %401 = vector.shape_cast %398 : vector<16x16xf32> to vector<1x1x16x16xf32>
    tpu.vector_store %arg6[%c0_243, %c1_244, %c0_245, %c0_246], %401 {strides = array<i32>} : memref<1x4x16x16xf32, #tpu.memory_space<vmem>>, vector<1x1x16x16xf32>,
    %c2_247 = arith.constant 2 : index
    %402 = memref.load %arg5[%c2_247] : memref<4xf32, #tpu.memory_space<smem>>
    %403 = vector.broadcast %402 : f32 to vector<16x16xf32>
    %404 = arith.addf %377, %403 : vector<16x16xf32>
    %cst_248 = arith.constant 1.000000e-01 : f32
    %405 = vector.broadcast %cst_248 : f32 to vector<16x16xf32>
    %406 = arith.mulf %405, %404 : vector<16x16xf32>
    %407 = arith.maximumf %404, %406 : vector<16x16xf32>
    %408 = arith.addf %407, %11 : vector<16x16xf32>
    %c0_249 = arith.constant 0 : index
    %c2_250 = arith.constant 2 : index
    %c0_251 = arith.constant 0 : index
    %c0_252 = arith.constant 0 : index
    %409 = vector.load %arg6[%c0_249, %c2_250, %c0_251, %c0_252] : memref<1x4x16x16xf32, #tpu.memory_space<vmem>>, vector<1x1x16x16xf32>
    %410 = vector.shape_cast %409 : vector<1x1x16x16xf32> to vector<16x16xf32>
    %411 = vector.shape_cast %408 : vector<16x16xf32> to vector<1x1x16x16xf32>
    tpu.vector_store %arg6[%c0_249, %c2_250, %c0_251, %c0_252], %411 {strides = array<i32>} : memref<1x4x16x16xf32, #tpu.memory_space<vmem>>, vector<1x1x16x16xf32>,
    %c3_253 = arith.constant 3 : index
    %412 = memref.load %arg5[%c3_253] : memref<4xf32, #tpu.memory_space<smem>>
    %413 = vector.broadcast %412 : f32 to vector<16x16xf32>
    %414 = arith.addf %381, %413 : vector<16x16xf32>
    %cst_254 = arith.constant 1.000000e-01 : f32
    %415 = vector.broadcast %cst_254 : f32 to vector<16x16xf32>
    %416 = arith.mulf %415, %414 : vector<16x16xf32>
    %417 = arith.maximumf %414, %416 : vector<16x16xf32>
    %418 = arith.addf %417, %13 : vector<16x16xf32>
    %c0_255 = arith.constant 0 : index
    %c3_256 = arith.constant 3 : index
    %c0_257 = arith.constant 0 : index
    %c0_258 = arith.constant 0 : index
    %419 = vector.load %arg6[%c0_255, %c3_256, %c0_257, %c0_258] : memref<1x4x16x16xf32, #tpu.memory_space<vmem>>, vector<1x1x16x16xf32>
    %420 = vector.shape_cast %419 : vector<1x1x16x16xf32> to vector<16x16xf32>
    %421 = vector.shape_cast %418 : vector<16x16xf32> to vector<1x1x16x16xf32>
    tpu.vector_store %arg6[%c0_255, %c3_256, %c0_257, %c0_258], %421 {strides = array<i32>} : memref<1x4x16x16xf32, #tpu.memory_space<vmem>>, vector<1x1x16x16xf32>,
    return
  }
  func.func @transform_0(%arg0: i32) -> (i32, i32, i32, i32) {
    %c0_i32 = arith.constant 0 : i32
    %c0_i32_0 = arith.constant 0 : i32
    %c0_i32_1 = arith.constant 0 : i32
    %c0_i32_2 = arith.constant 0 : i32
    return %arg0, %c0_i32, %c0_i32_0, %c0_i32_1 : i32, i32, i32, i32
  }
  func.func @transform_1(%arg0: i32) -> (i32, i32) {
    %c0_i32 = arith.constant 0 : i32
    %c0_i32_0 = arith.constant 0 : i32
    %c0_i32_1 = arith.constant 0 : i32
    return %c0_i32, %c0_i32_0 : i32, i32
  }
  func.func @transform_2(%arg0: i32) -> i32 {
    %c0_i32 = arith.constant 0 : i32
    %c0_i32_0 = arith.constant 0 : i32
    return %c0_i32 : i32
  }
  func.func @transform_3(%arg0: i32) -> (i32, i32) {
    %c0_i32 = arith.constant 0 : i32
    %c0_i32_0 = arith.constant 0 : i32
    %c0_i32_1 = arith.constant 0 : i32
    return %c0_i32, %c0_i32_0 : i32, i32
  }
  func.func @transform_4(%arg0: i32) -> i32 {
    %c0_i32 = arith.constant 0 : i32
    %c0_i32_0 = arith.constant 0 : i32
    return %c0_i32 : i32
  }
  func.func @transform_5(%arg0: i32) -> (i32, i32, i32, i32) {
    %c0_i32 = arith.constant 0 : i32
    %c0_i32_0 = arith.constant 0 : i32
    %c0_i32_1 = arith.constant 0 : i32
    %c0_i32_2 = arith.constant 0 : i32
    return %arg0, %c0_i32, %c0_i32_0, %c0_i32_1 : i32, i32, i32, i32
  }
}

</mosaic_0001>

<llo_original>
// kernel: basic_block.1
$region0: #{basic_block.1}
  #allocation0 [shape = 'u32[]', space=smem, size = 0x4, offset = 0x4, fixed_abs, tag = 'smem constant byte address 0x4 - core index']
  #allocation1 [shape = 'u32[144,128]{1,0:T(1,128)}', space=vmem, size = 0x12000, scoped, tag = 'internal scratch']
  #allocation2 [shape = 'f32[2,18,18]{2,1,0:T(8,128)}', space=vmem, size = 0x6000, scoped, tag = 'scratch operand']
  %s0 = inlined_call_operand.vmem [shape: f32[2,4,16,16], index: 0, kind: input, shape index: {}]
  %s1 = inlined_call_operand.vmem [shape: f32[2,4], index: 1, kind: input, shape index: {}]
  %s2 = inlined_call_operand.vmem [shape: f32[2], index: 2, kind: input, shape index: {}]
  %s3 = inlined_call_operand.vmem [shape: f32[4,18], index: 3, kind: input, shape index: {}]
  %s4 = inlined_call_operand.vmem [shape: f32[4], index: 4, kind: input, shape index: {}]
  %s5 = inlined_call_operand.hbm [shape: f32[2,4,16,16], index: 5, kind: output, shape index: {}]
  %s6 = sld [smem:[#allocation0]]
  $region69: #{basic_block.1} parent=0
    _
  %s8 = ssub.s32 1, %s6
  %s9 = scalar_select 0, %s8, %s6
  $region1: #{basic_block.1} parent=0
    #allocation3 [shape = 'u8[1024]{0}', space=smem, size = 0x400, scoped, tag = 'input window, operand 1, single buffered']
    #allocation4 [shape = 's32[2]{0}', space=sflag, size = 0x8, scoped, tag = 'scoped memory for basic_block.1']
    #allocation5 [shape = 's32[2]{0}', space=sflag, size = 0x8, scoped, tag = 'scoped memory for basic_block.1']
    #allocation6 [shape = 'u8[512]{0}', space=smem, size = 0x200, scoped, tag = 'input window, operand 2, single buffered']
    #allocation7 [shape = 's32[1]{0}', space=sflag, size = 0x4, scoped, tag = 'scoped memory for basic_block.1']
    #allocation8 [shape = 'u8[2048]{0}', space=smem, size = 0x800, scoped, tag = 'input window, operand 3, single buffered']
    #allocation9 [shape = 'u8[512]{0}', space=smem, size = 0x200, scoped, tag = 'input window, operand 4, single buffered']
    #allocation10 [shape = 's32[1]{0}', space=sflag, size = 0x4, scoped, tag = 'scoped memory for basic_block.1']
    #allocation11 [shape = 'u8[65536]{0}', space=vmem, size = 0x10000, scoped, tag = 'output window, operand 0']
    %10 = vsyncpa [#allocation5], 0
    %11 = vsyncpa [#allocation7], 0
    %12 = vsyncpa [#allocation10], 0
    %13 = vsyncpa [#allocation4], 0
    %s14 = scalar_lea.sflag [#allocation4], 1
    %15 = vsyncpa %s14, 0
    loop: start=0, step=1, limit=4
    $region2: #{basic_block.1} parent=1 // loop_pre_header
      _
    $region3: #{basic_block.1} parent=1 // loop_header
      %s17 = sphi 0, %s21
      %p18 = scmp.ge.s32.totalorder %s17, 4
      %s27 = sphi 0, %s29
      %s30 = sphi 0, %s27
      %s31 = sphi 0, %s30
      %s47 = sphi 0, %s31
      %s51 = sphi 0, %s51
      %s53 = sphi 0, %s51
      %s54 = sphi 0, %s53
      %s68 = sphi 0, %s54
      %s72 = sphi 0, %s72
      %s74 = sphi 0, %s72
      %s75 = sphi 0, %s74
      %s89 = sphi 0, %s75
      %s93 = sphi 0, %s93
      %s95 = sphi 0, %s93
      %s96 = sphi 0, %s95
      %s110 = sphi 0, %s96
      %s114 = sphi 0, %s114
      %s116 = sphi 0, %s114
      %s117 = sphi 0, %s116
      %s131 = sphi 0, %s117
      %s137 = sphi 0, %s139
      %s140 = sphi 0, %s137
      %s141 = sphi 0, %s140
      %s157 = sphi 0, %s141
    $region4: #{basic_block.1} parent=1 // loop_header_branch
      %20 = sbr.rel (%p18) target = $region8
    $region5: #{basic_block.1} parent=1 // loop_body
      %s22 = ssub.s32 %s17, 1
      %s23 = ssub.s32 %s17, 2
      %s24 = sadd.s32 %s17, 1
      %s25 = ssub.s32 %s17, %s24
      %p26 = scmp.eq.s32.totalorder %s25, 0
      %s28 = sadd.s32 %s27, 1
      %s29 = scalar_select %p26, %s27, %s28
      %p32 = pneg %p26
      %p33 = scmp.eq.s32.totalorder %s17, 1
      %p34 = por %p32, %p33
      %p35 = scmp.ne.s32.totalorder %s27, %s30
      %p36 = scmp.eq.s32.totalorder %s17, 0
      %p37 = por %p35, %p36
      %p38 = scmp.ne.s32.totalorder %s27, %s30
      %p39 = scmp.eq.s32.totalorder %s22, 1
      %p40 = por %p38, %p39
      %p41 = scmp.ne.s32.totalorder %s30, %s31
      %p42 = scmp.eq.s32.totalorder %s22, 0
      %p43 = por %p41, %p42
      %p44 = scmp.ne.s32.totalorder %s30, %s31
      %p45 = scmp.eq.s32.totalorder %s23, 1
      %p46 = por %p44, %p45
      %p48 = scmp.ne.s32.totalorder %s31, %s47
      %p49 = scmp.eq.s32.totalorder %s23, 0
      %p50 = por %p48, %p49
      %s52 = sadd.s32 %s51, 1
      %p55 = scmp.eq.s32.totalorder %s17, 1
      %p56 = scmp.ne.s32.totalorder %s51, %s53
      %p57 = scmp.eq.s32.totalorder %s17, 0
      %p58 = por %p56, %p57
      %p59 = scmp.ne.s32.totalorder %s51, %s53
      %p60 = scmp.eq.s32.totalorder %s22, 1
      %p61 = por %p59, %p60
      %p62 = scmp.ne.s32.totalorder %s53, %s54
      %p63 = scmp.eq.s32.totalorder %s22, 0
      %p64 = por %p62, %p63
      %p65 = scmp.ne.s32.totalorder %s53, %s54
      %p66 = scmp.eq.s32.totalorder %s23, 1
      %p67 = por %p65, %p66
      %p69 = scmp.ne.s32.totalorder %s54, %s68
      %p70 = scmp.eq.s32.totalorder %s23, 0
      %p71 = por %p69, %p70
      %s73 = sadd.s32 %s72, 1
      %p76 = scmp.eq.s32.totalorder %s17, 1
      %p77 = scmp.ne.s32.totalorder %s72, %s74
      %p78 = scmp.eq.s32.totalorder %s17, 0
      %p79 = por %p77, %p78
      %p80 = scmp.ne.s32.totalorder %s72, %s74
      %p81 = scmp.eq.s32.totalorder %s22, 1
      %p82 = por %p80, %p81
      %p83 = scmp.ne.s32.totalorder %s74, %s75
      %p84 = scmp.eq.s32.totalorder %s22, 0
      %p85 = por %p83, %p84
      %p86 = scmp.ne.s32.totalorder %s74, %s75
      %p87 = scmp.eq.s32.totalorder %s23, 1
      %p88 = por %p86, %p87
      %p90 = scmp.ne.s32.totalorder %s75, %s89
      %p91 = scmp.eq.s32.totalorder %s23, 0
      %p92 = por %p90, %p91
      %s94 = sadd.s32 %s93, 1
      %p97 = scmp.eq.s32.totalorder %s17, 1
      %p98 = scmp.ne.s32.totalorder %s93, %s95
      %p99 = scmp.eq.s32.totalorder %s17, 0
      %p100 = por %p98, %p99
      %p101 = scmp.ne.s32.totalorder %s93, %s95
      %p102 = scmp.eq.s32.totalorder %s22, 1
      %p103 = por %p101, %p102
      %p104 = scmp.ne.s32.totalorder %s95, %s96
      %p105 = scmp.eq.s32.totalorder %s22, 0
      %p106 = por %p104, %p105
      %p107 = scmp.ne.s32.totalorder %s95, %s96
      %p108 = scmp.eq.s32.totalorder %s23, 1
      %p109 = por %p107, %p108
      %p111 = scmp.ne.s32.totalorder %s96, %s110
      %p112 = scmp.eq.s32.totalorder %s23, 0
      %p113 = por %p111, %p112
      %s115 = sadd.s32 %s114, 1
      %p118 = scmp.eq.s32.totalorder %s17, 1
      %p119 = scmp.ne.s32.totalorder %s114, %s116
      %p120 = scmp.eq.s32.totalorder %s17, 0
      %p121 = por %p119, %p120
      %p122 = scmp.ne.s32.totalorder %s114, %s116
      %p123 = scmp.eq.s32.totalorder %s22, 1
      %p124 = por %p122, %p123
      %p125 = scmp.ne.s32.totalorder %s116, %s117
      %p126 = scmp.eq.s32.totalorder %s22, 0
      %p127 = por %p125, %p126
      %p128 = scmp.ne.s32.totalorder %s116, %s117
      %p129 = scmp.eq.s32.totalorder %s23, 1
      %p130 = por %p128, %p129
      %p132 = scmp.ne.s32.totalorder %s117, %s131
      %p133 = scmp.eq.s32.totalorder %s23, 0
      %p134 = por %p132, %p133
      %s135 = ssub.s32 %s17, %s24
      %p136 = scmp.eq.s32.totalorder %s135, 0
      %s138 = sadd.s32 %s137, 1
      %s139 = scalar_select %p136, %s137, %s138
      %p142 = pneg %p136
      %p143 = scmp.eq.s32.totalorder %s17, 1
      %p144 = por %p142, %p143
      %p145 = scmp.ne.s32.totalorder %s137, %s140
      %p146 = scmp.eq.s32.totalorder %s17, 0
      %p147 = por %p145, %p146
      %p148 = scmp.ne.s32.totalorder %s137, %s140
      %p149 = scmp.eq.s32.totalorder %s22, 1
      %p150 = por %p148, %p149
      %p151 = scmp.ne.s32.totalorder %s140, %s141
      %p152 = scmp.eq.s32.totalorder %s22, 0
      %p153 = por %p151, %p152
      %p154 = scmp.ne.s32.totalorder %s140, %s141
      %p155 = scmp.eq.s32.totalorder %s23, 1
      %p156 = por %p154, %p155
      %p158 = scmp.ne.s32.totalorder %s141, %s157
      %p159 = scmp.eq.s32.totalorder %s23, 0
      %p160 = por %p158, %p159
      %p161 = scmp.le.s32.totalorder 1, %s17
      %p162 = scmp.lt.s32.totalorder %s17, 3
      %p163 = pnand %p161, %p162
      %p164 = pneg %p163
      // Predicated region
      $region9: #{basic_block.1} parent=5 // pred_check
        _
      $region10: #{basic_block.1} parent=5 // pred_check_branch
        %166 = sbr.rel (%p163) target = $region12
      $region11: #{basic_block.1} parent=5 // pred_region
        %s167 = ssub.s32 %s17, 1
        // Predicated region
        $region13: #{basic_block.1} parent=11 // pred_check
          %p168 = pneg %p64
        $region14: #{basic_block.1} parent=11 // pred_check_branch
          %170 = sbr.rel (%p168) target = $region16
        $region15: #{basic_block.1} parent=11 // pred_region
          %s172 = ssub.s32 32, 32
          %173 = vsyncadd [#allocation5], %s172
          %s175 = sshll.u32 %s1, 4
          %s176 = int_to_ptr.vmem [resolvable:$true] %s175
          %178 = dma.vmem_to_smem %s176, 32, [#allocation3], [#allocation5]
        $region16: #{basic_block.1} parent=11 // pred_fallthru
          _
        // Predicated region
        $region17: #{basic_block.1} parent=11 // pred_check
          %p179 = pneg %p85
        $region18: #{basic_block.1} parent=11 // pred_check_branch
          %181 = sbr.rel (%p179) target = $region20
        $region19: #{basic_block.1} parent=11 // pred_region
          %s183 = ssub.s32 16, 16
          %184 = vsyncadd [#allocation7], %s183
          %s186 = sshll.u32 %s2, 4
          %s187 = int_to_ptr.vmem [resolvable:$true] %s186
          %189 = dma.vmem_to_smem %s187, 16, [#allocation6], [#allocation7]
        $region20: #{basic_block.1} parent=11 // pred_fallthru
          _
        // Predicated region
        $region21: #{basic_block.1} parent=11 // pred_check
          %p190 = pneg %p106
        $region22: #{basic_block.1} parent=11 // pred_check_branch
          %192 = sbr.rel (%p190) target = $region24
        $region23: #{basic_block.1} parent=11 // pred_region
          %s194 = ssub.s32 64, 64
          %195 = vsyncadd [#allocation7], %s194
          %s197 = sshll.u32 %s3, 4
          %s198 = int_to_ptr.vmem [resolvable:$true] %s197
          %200 = dma.vmem_to_smem %s198, 64, [#allocation8], [#allocation7]
        $region24: #{basic_block.1} parent=11 // pred_fallthru
          _
        // Predicated region
        $region25: #{basic_block.1} parent=11 // pred_check
          %p201 = pneg %p127
        $region26: #{basic_block.1} parent=11 // pred_check_branch
          %203 = sbr.rel (%p201) target = $region28
        $region27: #{basic_block.1} parent=11 // pred_region
          %s205 = ssub.s32 16, 16
          %206 = vsyncadd [#allocation10], %s205
          %s208 = sshll.u32 %s4, 4
          %s209 = int_to_ptr.vmem [resolvable:$true] %s208
          %211 = dma.vmem_to_smem %s209, 16, [#allocation9], [#allocation10]
        $region28: #{basic_block.1} parent=11 // pred_fallthru
          _
      $region12: #{basic_block.1} parent=5 // pred_fallthru
        _
      %p212 = scmp.lt.s32.totalorder %s17, 2
      // Predicated region
      $region29: #{basic_block.1} parent=5 // pred_check
        %p213 = pneg %p212
      $region30: #{basic_block.1} parent=5 // pred_check_branch
        %215 = sbr.rel (%p213) target = $region32
      $region31: #{basic_block.1} parent=5 // pred_region
        // Predicated region
        $region33: #{basic_block.1} parent=31 // pred_check
          %p216 = pneg %p37
        $region34: #{basic_block.1} parent=31 // pred_check_branch
          %218 = sbr.rel (%p216) target = $region36
        $region35: #{basic_block.1} parent=31 // pred_region
          %p219 = scmp.lt.s32.totalorder %s17, 1
          %s220 = scalar_select %p219, %s17, 1
          %s221 = smul.addr %s220, 8
          %s222 = smul.addr %s221, 8
          %s223 = scalar_lea.vmem %s0, %s222
        $region36: #{basic_block.1} parent=31 // pred_fallthru
          _
      $region32: #{basic_block.1} parent=5 // pred_fallthru
        _
      %p224 = scmp.le.s32.totalorder 1, %s17
      %p225 = scmp.lt.s32.totalorder %s17, 3
      %p226 = pnand %p224, %p225
      %p227 = pneg %p226
      // Predicated region
      $region37: #{basic_block.1} parent=5 // pred_check
        _
      $region38: #{basic_block.1} parent=5 // pred_check_branch
        %229 = sbr.rel (%p226) target = $region40
      $region39: #{basic_block.1} parent=5 // pred_region
        %s230 = ssub.s32 %s17, 1
        // Predicated region
        $region41: #{basic_block.1} parent=39 // pred_check
          %p231 = pneg %p64
        $region42: #{basic_block.1} parent=39 // pred_check_branch
          %233 = sbr.rel (%p231) target = $region44
        $region43: #{basic_block.1} parent=39 // pred_region
          %234 = dma.done [#allocation5], 32
        $region44: #{basic_block.1} parent=39 // pred_fallthru
          _
        // Predicated region
        $region45: #{basic_block.1} parent=39 // pred_check
          %p235 = pneg %p85
        $region46: #{basic_block.1} parent=39 // pred_check_branch
          %237 = sbr.rel (%p235) target = $region48
        $region47: #{basic_block.1} parent=39 // pred_region
          %238 = dma.done [#allocation7], 16
        $region48: #{basic_block.1} parent=39 // pred_fallthru
          _
        // Predicated region
        $region49: #{basic_block.1} parent=39 // pred_check
          %p239 = pneg %p106
        $region50: #{basic_block.1} parent=39 // pred_check_branch
          %241 = sbr.rel (%p239) target = $region52
        $region51: #{basic_block.1} parent=39 // pred_region
          %242 = dma.done [#allocation7], 64
        $region52: #{basic_block.1} parent=39 // pred_fallthru
          _
        // Predicated region
        $region53: #{basic_block.1} parent=39 // pred_check
          %p243 = pneg %p127
        $region54: #{basic_block.1} parent=39 // pred_check_branch
          %245 = sbr.rel (%p243) target = $region56
        $region55: #{basic_block.1} parent=39 // pred_region
          %246 = dma.done [#allocation10], 16
        $region56: #{basic_block.1} parent=39 // pred_fallthru
          _
        %247 = sfence
        %p248 = scmp.lt.s32.totalorder %s22, 1
        %s249 = scalar_select %p248, %s22, 1
        %s250 = smul.addr %s249, 8
        %s251 = smul.addr %s250, 8
        %s252 = scalar_lea.vmem %s0, %s251
        %p253 = pneg %p43
        %p254 = pneg %p40
        %p255 = pneg %p64
        %p256 = pneg %p61
        %p257 = pneg %p85
        %p258 = pneg %p82
        %p259 = pneg %p106
        %p260 = pneg %p103
        %p261 = pneg %p127
        %p262 = pneg %p124
        %p263 = pneg %p153
        %p264 = pneg %p150
        %s265 = sand.u32 %s140, 1
        %s266 = scalar_lea.sflag [#allocation4], %s265
        %s267 = sand.u32 %s140, 1
        %s268 = smul.addr %s267, 64
        %s269 = scalar_lea.vmem [#allocation11], %s268
        %p270 = scmp.lt.s32.totalorder %s22, 1
        %s271 = scalar_select %p270, %s22, 1
        %s272 = smul.addr %s271, 8
        %s273 = smul.addr %s272, 8
        %s274 = scalar_lea.vmem %s0, %s273
        %vm275 = vcmask 139264
        %276 = vst.msk [vmem:[#allocation2] sm:$0x1] %vm275, 0.0
        %277 = vst.msk [vmem:[#allocation2 + $0x18] sm:$0x1] %vm275, 0.0
        %278 = vst.msk [vmem:[#allocation2 + $0x11] sm:$0x1] %vm275, 0.0
        %279 = vst.msk [vmem:[#allocation2 + $0x29] sm:$0x1] %vm275, 0.0
        %vm280 = vcmask 7168
        %281 = vst.msk [vmem:[#allocation2] sm:$0xff] %vm280, 0.0
        %282 = vst.msk [vmem:[#allocation2 + $0x8] sm:$0xff] %vm280, 0.0
        %vm283 = vcmask 1024
        %284 = vst.msk [vmem:[#allocation2 + $0x10] sm:$0x3] %vm283, 0.0
        %285 = vst.msk [vmem:[#allocation2 + $0x18] sm:$0xff] %vm280, 0.0
        %286 = vst.msk [vmem:[#allocation2 + $0x20] sm:$0xff] %vm280, 0.0
        %287 = vst.msk [vmem:[#allocation2 + $0x28] sm:$0x3] %vm283, 0.0
        %vm288 = vcmask 146568
        %289 = vst.msk [vmem:[#allocation2] sm:$0xff] %vm288, 0.0
        %290 = vst.msk [vmem:[#allocation2 + $0x8] sm:$0xff] %vm288, 0.0
        %vm291 = vcmask 140424
        %292 = vst.msk [vmem:[#allocation2 + $0x10] sm:$0x3] %vm291, 0.0
        %293 = vst.msk [vmem:[#allocation2 + $0x18] sm:$0xff] %vm288, 0.0
        %294 = vst.msk [vmem:[#allocation2 + $0x20] sm:$0xff] %vm288, 0.0
        %295 = vst.msk [vmem:[#allocation2 + $0x28] sm:$0x3] %vm291, 0.0
        %v296 = vld [vmem:[%s274] sm:$0xff]
        %v297 = vld [vmem:[%s274 + $0x8] sm:$0xff]
        %s298 = scalar_lea.vmem %s274, 16
        %v299 = vld [vmem:[%s298] sm:$0xff]
        %v300 = vld [vmem:[%s298 + $0x8] sm:$0xff]
        %s301 = scalar_lea.vmem %s274, 32
        %v302 = vld [vmem:[%s301] sm:$0xff]
        %v303 = vld [vmem:[%s301 + $0x8] sm:$0xff]
        %s304 = scalar_lea.vmem %s274, 48
        %v305 = vld [vmem:[%s304] sm:$0xff]
        %v306 = vld [vmem:[%s304 + $0x8] sm:$0xff]
        %s307 = sld [smem:[#allocation3]]
        %v308 = vstv %s307
        %v309 = vmul.f32 %v308, %v296
        %v310 = vmul.f32 %v308, %v297
        %s311 = sld [smem:[#allocation3 + $0x1]]
        %v312 = vstv %s311
        %v313 = vmul.f32 %v312, %v299
        %v314 = vmul.f32 %v312, %v300
        %v315 = vadd.f32 %v309, %v313
        %v316 = vadd.f32 %v310, %v314
        %s317 = sld [smem:[#allocation3 + $0x2]]
        %v318 = vstv %s317
        %v319 = vmul.f32 %v318, %v302
        %v320 = vmul.f32 %v318, %v303
        %v321 = vadd.f32 %v315, %v319
        %v322 = vadd.f32 %v316, %v320
        %s323 = sld [smem:[#allocation3 + $0x3]]
        %v324 = vstv %s323
        %v325 = vmul.f32 %v324, %v305
        %v326 = vmul.f32 %v324, %v306
        %v327 = vadd.f32 %v321, %v325
        %v328 = vadd.f32 %v322, %v326
        %s329 = sld [smem:[#allocation6]]
        %v330 = vstv %s329
        %v331 = vadd.f32 %v327, %v330
        %v332 = vadd.f32 %v328, %v330
        %v333 = vmul.f32 %v331, 0.1
        %v334 = vmul.f32 %v332, 0.1
        %v335 = vmax.f32 %v331, %v333
        %v336 = vmax.f32 %v332, %v334
        %339 = vrot.lane.b32.xlu0 %v335, 1
        %v340 = vpop.permute.xlu0 %339
        %341 = vrot.lane.b32.xlu0 %v336, 1
        %v342 = vpop.permute.xlu0 %341
        %vm345 = vcmask 138248
        %346 = vst.msk [vmem:[#allocation2 + $0x1] sm:$0xff] %vm345, %v340
        %347 = vst.msk [vmem:[#allocation2 + $0x9] sm:$0xff] %vm345, %v342
        %s348 = sld [smem:[#allocation3 + $0x80]]
        %v349 = vstv %s348
        %v350 = vmul.f32 %v349, %v296
        %v351 = vmul.f32 %v349, %v297
        %s352 = sld [smem:[#allocation3 + $0x81]]
        %v353 = vstv %s352
        %v354 = vmul.f32 %v353, %v299
        %v355 = vmul.f32 %v353, %v300
        %v356 = vadd.f32 %v350, %v354
        %v357 = vadd.f32 %v351, %v355
        %s358 = sld [smem:[#allocation3 + $0x82]]
        %v359 = vstv %s358
        %v360 = vmul.f32 %v359, %v302
        %v361 = vmul.f32 %v359, %v303
        %v362 = vadd.f32 %v356, %v360
        %v363 = vadd.f32 %v357, %v361
        %s364 = sld [smem:[#allocation3 + $0x83]]
        %v365 = vstv %s364
        %v366 = vmul.f32 %v365, %v305
        %v367 = vmul.f32 %v365, %v306
        %v368 = vadd.f32 %v362, %v366
        %v369 = vadd.f32 %v363, %v367
        %s370 = sld [smem:[#allocation6 + $0x1]]
        %v371 = vstv %s370
        %v372 = vadd.f32 %v368, %v371
        %v373 = vadd.f32 %v369, %v371
        %v374 = vmul.f32 %v372, 0.1
        %v375 = vmul.f32 %v373, 0.1
        %v376 = vmax.f32 %v372, %v374
        %v377 = vmax.f32 %v373, %v375
        %380 = vrot.lane.b32.xlu0 %v376, 1
        %v381 = vpop.permute.xlu0 %380
        %382 = vrot.lane.b32.xlu0 %v377, 1
        %v383 = vpop.permute.xlu0 %382
        %s386 = scalar_lea.vmem [#allocation2], 24
        %387 = vst.msk [vmem:[%s386 + $0x1] sm:$0xff] %vm345, %v381
        %388 = vst.msk [vmem:[%s386 + $0x9] sm:$0xff] %vm345, %v383
        %v389 = vld [vmem:[#allocation2] sm:$0xff]
        %v390 = vld [vmem:[#allocation2 + $0x8] sm:$0xff]
        %s391 = sld [smem:[#allocation8]]
        %v392 = vstv %s391
        %v393 = vmul.f32 %v392, %v389
        %v394 = vmul.f32 %v392, %v390
        %s395 = sld [smem:[#allocation8 + $0x80]]
        %v396 = vstv %s395
        %v397 = vmul.f32 %v396, %v389
        %v398 = vmul.f32 %v396, %v390
        %s399 = sld [smem:[#allocation8 + $0x100]]
        %v400 = vstv %s399
        %v401 = vmul.f32 %v400, %v389
        %v402 = vmul.f32 %v400, %v390
        %s403 = sld [smem:[#allocation8 + $0x180]]
        %v404 = vstv %s403
        %v405 = vmul.f32 %v404, %v389
        %v406 = vmul.f32 %v404, %v390
        %s407 = sld [smem:[#allocation8 + $0x1]]
        %v408 = vstv %s407
        %v409 = vmul.f32 %v408, %v389
        %v410 = vmul.f32 %v408, %v390
        %413 = vrot.lane.b32.xlu0 %v409, 127
        %v414 = vpop.permute.xlu0 %413
        %415 = vrot.lane.b32.xlu0 %v410, 127
        %v416 = vpop.permute.xlu0 %415
        %v419 = vadd.f32 %v393, %v414
        %v420 = vadd.f32 %v394, %v416
        %s421 = sld [smem:[#allocation8 + $0x81]]
        %v422 = vstv %s421
        %v423 = vmul.f32 %v422, %v389
        %v424 = vmul.f32 %v422, %v390
        %427 = vrot.lane.b32.xlu0 %v423, 127
        %v428 = vpop.permute.xlu0 %427
        %429 = vrot.lane.b32.xlu0 %v424, 127
        %v430 = vpop.permute.xlu0 %429
        %v433 = vadd.f32 %v397, %v428
        %v434 = vadd.f32 %v398, %v430
        %s435 = sld [smem:[#allocation8 + $0x101]]
        %v436 = vstv %s435
        %v437 = vmul.f32 %v436, %v389
        %v438 = vmul.f32 %v436, %v390
        %441 = vrot.lane.b32.xlu0 %v437, 127
        %v442 = vpop.permute.xlu0 %441
        %443 = vrot.lane.b32.xlu0 %v438, 127
        %v444 = vpop.permute.xlu0 %443
        %v447 = vadd.f32 %v401, %v442
        %v448 = vadd.f32 %v402, %v444
        %s449 = sld [smem:[#allocation8 + $0x181]]
        %v450 = vstv %s449
        %v451 = vmul.f32 %v450, %v389
        %v452 = vmul.f32 %v450, %v390
        %455 = vrot.lane.b32.xlu0 %v451, 127
        %v456 = vpop.permute.xlu0 %455
        %457 = vrot.lane.b32.xlu0 %v452, 127
        %v458 = vpop.permute.xlu0 %457
        %v461 = vadd.f32 %v405, %v456
        %v462 = vadd.f32 %v406, %v458
        %s463 = sld [smem:[#allocation8 + $0x2]]
        %v464 = vstv %s463
        %v465 = vmul.f32 %v464, %v389
        %v466 = vmul.f32 %v464, %v390
        %469 = vrot.lane.b32.xlu0 %v465, 126
        %v470 = vpop.permute.xlu0 %469
        %471 = vrot.lane.b32.xlu0 %v466, 126
        %v472 = vpop.permute.xlu0 %471
        %v475 = vadd.f32 %v419, %v470
        %v476 = vadd.f32 %v420, %v472
        %s477 = sld [smem:[#allocation8 + $0x82]]
        %v478 = vstv %s477
        %v479 = vmul.f32 %v478, %v389
        %v480 = vmul.f32 %v478, %v390
        %483 = vrot.lane.b32.xlu0 %v479, 126
        %v484 = vpop.permute.xlu0 %483
        %485 = vrot.lane.b32.xlu0 %v480, 126
        %v486 = vpop.permute.xlu0 %485
        %v489 = vadd.f32 %v433, %v484
        %v490 = vadd.f32 %v434, %v486
        %s491 = sld [smem:[#allocation8 + $0x102]]
        %v492 = vstv %s491
        %v493 = vmul.f32 %v492, %v389
        %v494 = vmul.f32 %v492, %v390
        %497 = vrot.lane.b32.xlu0 %v493, 126
        %v498 = vpop.permute.xlu0 %497
        %499 = vrot.lane.b32.xlu0 %v494, 126
        %v500 = vpop.permute.xlu0 %499
        %v503 = vadd.f32 %v447, %v498
        %v504 = vadd.f32 %v448, %v500
        %s505 = sld [smem:[#allocation8 + $0x182]]
        %v506 = vstv %s505
        %v507 = vmul.f32 %v506, %v389
        %v508 = vmul.f32 %v506, %v390
        %511 = vrot.lane.b32.xlu0 %v507, 126
        %v512 = vpop.permute.xlu0 %511
        %513 = vrot.lane.b32.xlu0 %v508, 126
        %v514 = vpop.permute.xlu0 %513
        %v517 = vadd.f32 %v461, %v512
        %v518 = vadd.f32 %v462, %v514
        %v519 = vld [vmem:[#allocation2 + $0x1] sm:$0xff]
        %v520 = vld [vmem:[#allocation2 + $0x9] sm:$0xff]
        %s521 = sld [smem:[#allocation8 + $0x3]]
        %v522 = vstv %s521
        %v523 = vmul.f32 %v522, %v519
        %v524 = vmul.f32 %v522, %v520
        %v525 = vadd.f32 %v475, %v523
        %v526 = vadd.f32 %v476, %v524
        %s527 = sld [smem:[#allocation8 + $0x83]]
        %v528 = vstv %s527
        %v529 = vmul.f32 %v528, %v519
        %v530 = vmul.f32 %v528, %v520
        %v531 = vadd.f32 %v489, %v529
        %v532 = vadd.f32 %v490, %v530
        %s533 = sld [smem:[#allocation8 + $0x103]]
        %v534 = vstv %s533
        %v535 = vmul.f32 %v534, %v519
        %v536 = vmul.f32 %v534, %v520
        %v537 = vadd.f32 %v503, %v535
        %v538 = vadd.f32 %v504, %v536
        %s539 = sld [smem:[#allocation8 + $0x183]]
        %v540 = vstv %s539
        %v541 = vmul.f32 %v540, %v519
        %v542 = vmul.f32 %v540, %v520
        %v543 = vadd.f32 %v517, %v541
        %v544 = vadd.f32 %v518, %v542
        %s545 = sld [smem:[#allocation8 + $0x4]]
        %v546 = vstv %s545
        %v547 = vmul.f32 %v546, %v519
        %v548 = vmul.f32 %v546, %v520
        %551 = vrot.lane.b32.xlu0 %v547, 127
        %v552 = vpop.permute.xlu0 %551
        %553 = vrot.lane.b32.xlu0 %v548, 127
        %v554 = vpop.permute.xlu0 %553
        %v557 = vadd.f32 %v525, %v552
        %v558 = vadd.f32 %v526, %v554
        %s559 = sld [smem:[#allocation8 + $0x84]]
        %v560 = vstv %s559
        %v561 = vmul.f32 %v560, %v519
        %v562 = vmul.f32 %v560, %v520
        %565 = vrot.lane.b32.xlu0 %v561, 127
        %v566 = vpop.permute.xlu0 %565
        %567 = vrot.lane.b32.xlu0 %v562, 127
        %v568 = vpop.permute.xlu0 %567
        %v571 = vadd.f32 %v531, %v566
        %v572 = vadd.f32 %v532, %v568
        %s573 = sld [smem:[#allocation8 + $0x104]]
        %v574 = vstv %s573
        %v575 = vmul.f32 %v574, %v519
        %v576 = vmul.f32 %v574, %v520
        %579 = vrot.lane.b32.xlu0 %v575, 127
        %v580 = vpop.permute.xlu0 %579
        %581 = vrot.lane.b32.xlu0 %v576, 127
        %v582 = vpop.permute.xlu0 %581
        %v585 = vadd.f32 %v537, %v580
        %v586 = vadd.f32 %v538, %v582
        %s587 = sld [smem:[#allocation8 + $0x184]]
        %v588 = vstv %s587
        %v589 = vmul.f32 %v588, %v519
        %v590 = vmul.f32 %v588, %v520
        %593 = vrot.lane.b32.xlu0 %v589, 127
        %v594 = vpop.permute.xlu0 %593
        %595 = vrot.lane.b32.xlu0 %v590, 127
        %v596 = vpop.permute.xlu0 %595
        %v599 = vadd.f32 %v543, %v594
        %v600 = vadd.f32 %v544, %v596
        %s601 = sld [smem:[#allocation8 + $0x5]]
        %v602 = vstv %s601
        %v603 = vmul.f32 %v602, %v519
        %v604 = vmul.f32 %v602, %v520
        %607 = vrot.lane.b32.xlu0 %v603, 126
        %v608 = vpop.permute.xlu0 %607
        %609 = vrot.lane.b32.xlu0 %v604, 126
        %v610 = vpop.permute.xlu0 %609
        %v613 = vadd.f32 %v557, %v608
        %v614 = vadd.f32 %v558, %v610
        %s615 = sld [smem:[#allocation8 + $0x85]]
        %v616 = vstv %s615
        %v617 = vmul.f32 %v616, %v519
        %v618 = vmul.f32 %v616, %v520
        %621 = vrot.lane.b32.xlu0 %v617, 126
        %v622 = vpop.permute.xlu0 %621
        %623 = vrot.lane.b32.xlu0 %v618, 126
        %v624 = vpop.permute.xlu0 %623
        %v627 = vadd.f32 %v571, %v622
        %v628 = vadd.f32 %v572, %v624
        %s629 = sld [smem:[#allocation8 + $0x105]]
        %v630 = vstv %s629
        %v631 = vmul.f32 %v630, %v519
        %v632 = vmul.f32 %v630, %v520
        %635 = vrot.lane.b32.xlu0 %v631, 126
        %v636 = vpop.permute.xlu0 %635
        %637 = vrot.lane.b32.xlu0 %v632, 126
        %v638 = vpop.permute.xlu0 %637
        %v641 = vadd.f32 %v585, %v636
        %v642 = vadd.f32 %v586, %v638
        %s643 = sld [smem:[#allocation8 + $0x185]]
        %v644 = vstv %s643
        %v645 = vmul.f32 %v644, %v519
        %v646 = vmul.f32 %v644, %v520
        %649 = vrot.lane.b32.xlu0 %v645, 126
        %v650 = vpop.permute.xlu0 %649
        %651 = vrot.lane.b32.xlu0 %v646, 126
        %v652 = vpop.permute.xlu0 %651
        %v655 = vadd.f32 %v599, %v650
        %v656 = vadd.f32 %v600, %v652
        %v657 = vld [vmem:[#allocation2 + $0x2] sm:$0xff]
        %v658 = vld [vmem:[#allocation2 + $0xa] sm:$0xff]
        %s659 = sld [smem:[#allocation8 + $0x6]]
        %v660 = vstv %s659
        %v661 = vmul.f32 %v660, %v657
        %v662 = vmul.f32 %v660, %v658
        %v663 = vadd.f32 %v613, %v661
        %v664 = vadd.f32 %v614, %v662
        %s665 = sld [smem:[#allocation8 + $0x86]]
        %v666 = vstv %s665
        %v667 = vmul.f32 %v666, %v657
        %v668 = vmul.f32 %v666, %v658
        %v669 = vadd.f32 %v627, %v667
        %v670 = vadd.f32 %v628, %v668
        %s671 = sld [smem:[#allocation8 + $0x106]]
        %v672 = vstv %s671
        %v673 = vmul.f32 %v672, %v657
        %v674 = vmul.f32 %v672, %v658
        %v675 = vadd.f32 %v641, %v673
        %v676 = vadd.f32 %v642, %v674
        %s677 = sld [smem:[#allocation8 + $0x186]]
        %v678 = vstv %s677
        %v679 = vmul.f32 %v678, %v657
        %v680 = vmul.f32 %v678, %v658
        %v681 = vadd.f32 %v655, %v679
        %v682 = vadd.f32 %v656, %v680
        %s683 = sld [smem:[#allocation8 + $0x7]]
        %v684 = vstv %s683
        %v685 = vmul.f32 %v684, %v657
        %v686 = vmul.f32 %v684, %v658
        %689 = vrot.lane.b32.xlu0 %v685, 127
        %v690 = vpop.permute.xlu0 %689
        %691 = vrot.lane.b32.xlu0 %v686, 127
        %v692 = vpop.permute.xlu0 %691
        %v695 = vadd.f32 %v663, %v690
        %v696 = vadd.f32 %v664, %v692
        %s697 = sld [smem:[#allocation8 + $0x87]]
        %v698 = vstv %s697
        %v699 = vmul.f32 %v698, %v657
        %v700 = vmul.f32 %v698, %v658
        %703 = vrot.lane.b32.xlu0 %v699, 127
        %v704 = vpop.permute.xlu0 %703
        %705 = vrot.lane.b32.xlu0 %v700, 127
        %v706 = vpop.permute.xlu0 %705
        %v709 = vadd.f32 %v669, %v704
        %v710 = vadd.f32 %v670, %v706
        %s711 = sld [smem:[#allocation8 + $0x107]]
        %v712 = vstv %s711
        %v713 = vmul.f32 %v712, %v657
        %v714 = vmul.f32 %v712, %v658
        %717 = vrot.lane.b32.xlu0 %v713, 127
        %v718 = vpop.permute.xlu0 %717
        %719 = vrot.lane.b32.xlu0 %v714, 127
        %v720 = vpop.permute.xlu0 %719
        %v723 = vadd.f32 %v675, %v718
        %v724 = vadd.f32 %v676, %v720
        %s725 = sld [smem:[#allocation8 + $0x187]]
        %v726 = vstv %s725
        %v727 = vmul.f32 %v726, %v657
        %v728 = vmul.f32 %v726, %v658
        %731 = vrot.lane.b32.xlu0 %v727, 127
        %v732 = vpop.permute.xlu0 %731
        %733 = vrot.lane.b32.xlu0 %v728, 127
        %v734 = vpop.permute.xlu0 %733
        %v737 = vadd.f32 %v681, %v732
        %v738 = vadd.f32 %v682, %v734
        %s739 = sld [smem:[#allocation8 + $0x8]]
        %v740 = vstv %s739
        %v741 = vmul.f32 %v740, %v657
        %v742 = vmul.f32 %v740, %v658
        %745 = vrot.lane.b32.xlu0 %v741, 126
        %v746 = vpop.permute.xlu0 %745
        %747 = vrot.lane.b32.xlu0 %v742, 126
        %v748 = vpop.permute.xlu0 %747
        %v751 = vadd.f32 %v695, %v746
        %v752 = vadd.f32 %v696, %v748
        %s753 = sld [smem:[#allocation8 + $0x88]]
        %v754 = vstv %s753
        %v755 = vmul.f32 %v754, %v657
        %v756 = vmul.f32 %v754, %v658
        %759 = vrot.lane.b32.xlu0 %v755, 126
        %v760 = vpop.permute.xlu0 %759
        %761 = vrot.lane.b32.xlu0 %v756, 126
        %v762 = vpop.permute.xlu0 %761
        %v765 = vadd.f32 %v709, %v760
        %v766 = vadd.f32 %v710, %v762
        %s767 = sld [smem:[#allocation8 + $0x108]]
        %v768 = vstv %s767
        %v769 = vmul.f32 %v768, %v657
        %v770 = vmul.f32 %v768, %v658
        %773 = vrot.lane.b32.xlu0 %v769, 126
        %v774 = vpop.permute.xlu0 %773
        %775 = vrot.lane.b32.xlu0 %v770, 126
        %v776 = vpop.permute.xlu0 %775
        %v779 = vadd.f32 %v723, %v774
        %v780 = vadd.f32 %v724, %v776
        %s781 = sld [smem:[#allocation8 + $0x188]]
        %v782 = vstv %s781
        %v783 = vmul.f32 %v782, %v657
        %v784 = vmul.f32 %v782, %v658
        %787 = vrot.lane.b32.xlu0 %v783, 126
        %v788 = vpop.permute.xlu0 %787
        %789 = vrot.lane.b32.xlu0 %v784, 126
        %v790 = vpop.permute.xlu0 %789
        %v793 = vadd.f32 %v737, %v788
        %v794 = vadd.f32 %v738, %v790
        %v795 = vld [vmem:[%s386] sm:$0xff]
        %v796 = vld [vmem:[%s386 + $0x8] sm:$0xff]
        %s797 = sld [smem:[#allocation8 + $0x9]]
        %v798 = vstv %s797
        %v799 = vmul.f32 %v798, %v795
        %v800 = vmul.f32 %v798, %v796
        %v801 = vadd.f32 %v751, %v799
        %v802 = vadd.f32 %v752, %v800
        %s803 = sld [smem:[#allocation8 + $0x89]]
        %v804 = vstv %s803
        %v805 = vmul.f32 %v804, %v795
        %v806 = vmul.f32 %v804, %v796
        %v807 = vadd.f32 %v765, %v805
        %v808 = vadd.f32 %v766, %v806
        %s809 = sld [smem:[#allocation8 + $0x109]]
        %v810 = vstv %s809
        %v811 = vmul.f32 %v810, %v795
        %v812 = vmul.f32 %v810, %v796
        %v813 = vadd.f32 %v779, %v811
        %v814 = vadd.f32 %v780, %v812
        %s815 = sld [smem:[#allocation8 + $0x189]]
        %v816 = vstv %s815
        %v817 = vmul.f32 %v816, %v795
        %v818 = vmul.f32 %v816, %v796
        %v819 = vadd.f32 %v793, %v817
        %v820 = vadd.f32 %v794, %v818
        %s821 = sld [smem:[#allocation8 + $0xa]]
        %v822 = vstv %s821
        %v823 = vmul.f32 %v822, %v795
        %v824 = vmul.f32 %v822, %v796
        %827 = vrot.lane.b32.xlu0 %v823, 127
        %v828 = vpop.permute.xlu0 %827
        %829 = vrot.lane.b32.xlu0 %v824, 127
        %v830 = vpop.permute.xlu0 %829
        %v833 = vadd.f32 %v801, %v828
        %v834 = vadd.f32 %v802, %v830
        %s835 = sld [smem:[#allocation8 + $0x8a]]
        %v836 = vstv %s835
        %v837 = vmul.f32 %v836, %v795
        %v838 = vmul.f32 %v836, %v796
        %841 = vrot.lane.b32.xlu0 %v837, 127
        %v842 = vpop.permute.xlu0 %841
        %843 = vrot.lane.b32.xlu0 %v838, 127
        %v844 = vpop.permute.xlu0 %843
        %v847 = vadd.f32 %v807, %v842
        %v848 = vadd.f32 %v808, %v844
        %s849 = sld [smem:[#allocation8 + $0x10a]]
        %v850 = vstv %s849
        %v851 = vmul.f32 %v850, %v795
        %v852 = vmul.f32 %v850, %v796
        %855 = vrot.lane.b32.xlu0 %v851, 127
        %v856 = vpop.permute.xlu0 %855
        %857 = vrot.lane.b32.xlu0 %v852, 127
        %v858 = vpop.permute.xlu0 %857
        %v861 = vadd.f32 %v813, %v856
        %v862 = vadd.f32 %v814, %v858
        %s863 = sld [smem:[#allocation8 + $0x18a]]
        %v864 = vstv %s863
        %v865 = vmul.f32 %v864, %v795
        %v866 = vmul.f32 %v864, %v796
        %869 = vrot.lane.b32.xlu0 %v865, 127
        %v870 = vpop.permute.xlu0 %869
        %871 = vrot.lane.b32.xlu0 %v866, 127
        %v872 = vpop.permute.xlu0 %871
        %v875 = vadd.f32 %v819, %v870
        %v876 = vadd.f32 %v820, %v872
        %s877 = sld [smem:[#allocation8 + $0xb]]
        %v878 = vstv %s877
        %v879 = vmul.f32 %v878, %v795
        %v880 = vmul.f32 %v878, %v796
        %883 = vrot.lane.b32.xlu0 %v879, 126
        %v884 = vpop.permute.xlu0 %883
        %885 = vrot.lane.b32.xlu0 %v880, 126
        %v886 = vpop.permute.xlu0 %885
        %v889 = vadd.f32 %v833, %v884
        %v890 = vadd.f32 %v834, %v886
        %s891 = sld [smem:[#allocation8 + $0x8b]]
        %v892 = vstv %s891
        %v893 = vmul.f32 %v892, %v795
        %v894 = vmul.f32 %v892, %v796
        %897 = vrot.lane.b32.xlu0 %v893, 126
        %v898 = vpop.permute.xlu0 %897
        %899 = vrot.lane.b32.xlu0 %v894, 126
        %v900 = vpop.permute.xlu0 %899
        %v903 = vadd.f32 %v847, %v898
        %v904 = vadd.f32 %v848, %v900
        %s905 = sld [smem:[#allocation8 + $0x10b]]
        %v906 = vstv %s905
        %v907 = vmul.f32 %v906, %v795
        %v908 = vmul.f32 %v906, %v796
        %911 = vrot.lane.b32.xlu0 %v907, 126
        %v912 = vpop.permute.xlu0 %911
        %913 = vrot.lane.b32.xlu0 %v908, 126
        %v914 = vpop.permute.xlu0 %913
        %v917 = vadd.f32 %v861, %v912
        %v918 = vadd.f32 %v862, %v914
        %s919 = sld [smem:[#allocation8 + $0x18b]]
        %v920 = vstv %s919
        %v921 = vmul.f32 %v920, %v795
        %v922 = vmul.f32 %v920, %v796
        %925 = vrot.lane.b32.xlu0 %v921, 126
        %v926 = vpop.permute.xlu0 %925
        %927 = vrot.lane.b32.xlu0 %v922, 126
        %v928 = vpop.permute.xlu0 %927
        %v931 = vadd.f32 %v875, %v926
        %v932 = vadd.f32 %v876, %v928
        %v933 = vld [vmem:[%s386 + $0x1] sm:$0xff]
        %v934 = vld [vmem:[%s386 + $0x9] sm:$0xff]
        %s935 = sld [smem:[#allocation8 + $0xc]]
        %v936 = vstv %s935
        %v937 = vmul.f32 %v936, %v933
        %v938 = vmul.f32 %v936, %v934
        %v939 = vadd.f32 %v889, %v937
        %v940 = vadd.f32 %v890, %v938
        %s941 = sld [smem:[#allocation8 + $0x8c]]
        %v942 = vstv %s941
        %v943 = vmul.f32 %v942, %v933
        %v944 = vmul.f32 %v942, %v934
        %v945 = vadd.f32 %v903, %v943
        %v946 = vadd.f32 %v904, %v944
        %s947 = sld [smem:[#allocation8 + $0x10c]]
        %v948 = vstv %s947
        %v949 = vmul.f32 %v948, %v933
        %v950 = vmul.f32 %v948, %v934
        %v951 = vadd.f32 %v917, %v949
        %v952 = vadd.f32 %v918, %v950
        %s953 = sld [smem:[#allocation8 + $0x18c]]
        %v954 = vstv %s953
        %v955 = vmul.f32 %v954, %v933
        %v956 = vmul.f32 %v954, %v934
        %v957 = vadd.f32 %v931, %v955
        %v958 = vadd.f32 %v932, %v956
        %s959 = sld [smem:[#allocation8 + $0xd]]
        %v960 = vstv %s959
        %v961 = vmul.f32 %v960, %v933
        %v962 = vmul.f32 %v960, %v934
        %965 = vrot.lane.b32.xlu0 %v961, 127
        %v966 = vpop.permute.xlu0 %965
        %967 = vrot.lane.b32.xlu0 %v962, 127
        %v968 = vpop.permute.xlu0 %967
        %v971 = vadd.f32 %v939, %v966
        %v972 = vadd.f32 %v940, %v968
        %s973 = sld [smem:[#allocation8 + $0x8d]]
        %v974 = vstv %s973
        %v975 = vmul.f32 %v974, %v933
        %v976 = vmul.f32 %v974, %v934
        %979 = vrot.lane.b32.xlu0 %v975, 127
        %v980 = vpop.permute.xlu0 %979
        %981 = vrot.lane.b32.xlu0 %v976, 127
        %v982 = vpop.permute.xlu0 %981
        %v985 = vadd.f32 %v945, %v980
        %v986 = vadd.f32 %v946, %v982
        %s987 = sld [smem:[#allocation8 + $0x10d]]
        %v988 = vstv %s987
        %v989 = vmul.f32 %v988, %v933
        %v990 = vmul.f32 %v988, %v934
        %993 = vrot.lane.b32.xlu0 %v989, 127
        %v994 = vpop.permute.xlu0 %993
        %995 = vrot.lane.b32.xlu0 %v990, 127
        %v996 = vpop.permute.xlu0 %995
        %v999 = vadd.f32 %v951, %v994
        %v1000 = vadd.f32 %v952, %v996
        %s1001 = sld [smem:[#allocation8 + $0x18d]]
        %v1002 = vstv %s1001
        %v1003 = vmul.f32 %v1002, %v933
        %v1004 = vmul.f32 %v1002, %v934
        %1007 = vrot.lane.b32.xlu0 %v1003, 127
        %v1008 = vpop.permute.xlu0 %1007
        %1009 = vrot.lane.b32.xlu0 %v1004, 127
        %v1010 = vpop.permute.xlu0 %1009
        %v1013 = vadd.f32 %v957, %v1008
        %v1014 = vadd.f32 %v958, %v1010
        %s1015 = sld [smem:[#allocation8 + $0xe]]
        %v1016 = vstv %s1015
        %v1017 = vmul.f32 %v1016, %v933
        %v1018 = vmul.f32 %v1016, %v934
        %1021 = vrot.lane.b32.xlu0 %v1017, 126
        %v1022 = vpop.permute.xlu0 %1021
        %1023 = vrot.lane.b32.xlu0 %v1018, 126
        %v1024 = vpop.permute.xlu0 %1023
        %v1027 = vadd.f32 %v971, %v1022
        %v1028 = vadd.f32 %v972, %v1024
        %s1029 = sld [smem:[#allocation8 + $0x8e]]
        %v1030 = vstv %s1029
        %v1031 = vmul.f32 %v1030, %v933
        %v1032 = vmul.f32 %v1030, %v934
        %1035 = vrot.lane.b32.xlu0 %v1031, 126
        %v1036 = vpop.permute.xlu0 %1035
        %1037 = vrot.lane.b32.xlu0 %v1032, 126
        %v1038 = vpop.permute.xlu0 %1037
        %v1041 = vadd.f32 %v985, %v1036
        %v1042 = vadd.f32 %v986, %v1038
        %s1043 = sld [smem:[#allocation8 + $0x10e]]
        %v1044 = vstv %s1043
        %v1045 = vmul.f32 %v1044, %v933
        %v1046 = vmul.f32 %v1044, %v934
        %1049 = vrot.lane.b32.xlu0 %v1045, 126
        %v1050 = vpop.permute.xlu0 %1049
        %1051 = vrot.lane.b32.xlu0 %v1046, 126
        %v1052 = vpop.permute.xlu0 %1051
        %v1055 = vadd.f32 %v999, %v1050
        %v1056 = vadd.f32 %v1000, %v1052
        %s1057 = sld [smem:[#allocation8 + $0x18e]]
        %v1058 = vstv %s1057
        %v1059 = vmul.f32 %v1058, %v933
        %v1060 = vmul.f32 %v1058, %v934
        %1063 = vrot.lane.b32.xlu0 %v1059, 126
        %v1064 = vpop.permute.xlu0 %1063
        %1065 = vrot.lane.b32.xlu0 %v1060, 126
        %v1066 = vpop.permute.xlu0 %1065
        %v1069 = vadd.f32 %v1013, %v1064
        %v1070 = vadd.f32 %v1014, %v1066
        %v1071 = vld [vmem:[%s386 + $0x2] sm:$0xff]
        %v1072 = vld [vmem:[%s386 + $0xa] sm:$0xff]
        %s1073 = sld [smem:[#allocation8 + $0xf]]
        %v1074 = vstv %s1073
        %v1075 = vmul.f32 %v1074, %v1071
        %v1076 = vmul.f32 %v1074, %v1072
        %v1077 = vadd.f32 %v1027, %v1075
        %v1078 = vadd.f32 %v1028, %v1076
        %s1079 = sld [smem:[#allocation8 + $0x8f]]
        %v1080 = vstv %s1079
        %v1081 = vmul.f32 %v1080, %v1071
        %v1082 = vmul.f32 %v1080, %v1072
        %v1083 = vadd.f32 %v1041, %v1081
        %v1084 = vadd.f32 %v1042, %v1082
        %s1085 = sld [smem:[#allocation8 + $0x10f]]
        %v1086 = vstv %s1085
        %v1087 = vmul.f32 %v1086, %v1071
        %v1088 = vmul.f32 %v1086, %v1072
        %v1089 = vadd.f32 %v1055, %v1087
        %v1090 = vadd.f32 %v1056, %v1088
        %s1091 = sld [smem:[#allocation8 + $0x18f]]
        %v1092 = vstv %s1091
        %v1093 = vmul.f32 %v1092, %v1071
        %v1094 = vmul.f32 %v1092, %v1072
        %v1095 = vadd.f32 %v1069, %v1093
        %v1096 = vadd.f32 %v1070, %v1094
        %s1097 = sld [smem:[#allocation8 + $0x10]]
        %v1098 = vstv %s1097
        %v1099 = vmul.f32 %v1098, %v1071
        %v1100 = vmul.f32 %v1098, %v1072
        %1103 = vrot.lane.b32.xlu0 %v1099, 127
        %v1104 = vpop.permute.xlu0 %1103
        %1105 = vrot.lane.b32.xlu0 %v1100, 127
        %v1106 = vpop.permute.xlu0 %1105
        %v1109 = vadd.f32 %v1077, %v1104
        %v1110 = vadd.f32 %v1078, %v1106
        %s1111 = sld [smem:[#allocation8 + $0x90]]
        %v1112 = vstv %s1111
        %v1113 = vmul.f32 %v1112, %v1071
        %v1114 = vmul.f32 %v1112, %v1072
        %1117 = vrot.lane.b32.xlu0 %v1113, 127
        %v1118 = vpop.permute.xlu0 %1117
        %1119 = vrot.lane.b32.xlu0 %v1114, 127
        %v1120 = vpop.permute.xlu0 %1119
        %v1123 = vadd.f32 %v1083, %v1118
        %v1124 = vadd.f32 %v1084, %v1120
        %s1125 = sld [smem:[#allocation8 + $0x110]]
        %v1126 = vstv %s1125
        %v1127 = vmul.f32 %v1126, %v1071
        %v1128 = vmul.f32 %v1126, %v1072
        %1131 = vrot.lane.b32.xlu0 %v1127, 127
        %v1132 = vpop.permute.xlu0 %1131
        %1133 = vrot.lane.b32.xlu0 %v1128, 127
        %v1134 = vpop.permute.xlu0 %1133
        %v1137 = vadd.f32 %v1089, %v1132
        %v1138 = vadd.f32 %v1090, %v1134
        %s1139 = sld [smem:[#allocation8 + $0x190]]
        %v1140 = vstv %s1139
        %v1141 = vmul.f32 %v1140, %v1071
        %v1142 = vmul.f32 %v1140, %v1072
        %1145 = vrot.lane.b32.xlu0 %v1141, 127
        %v1146 = vpop.permute.xlu0 %1145
        %1147 = vrot.lane.b32.xlu0 %v1142, 127
        %v1148 = vpop.permute.xlu0 %1147
        %v1151 = vadd.f32 %v1095, %v1146
        %v1152 = vadd.f32 %v1096, %v1148
        %s1153 = sld [smem:[#allocation8 + $0x11]]
        %v1154 = vstv %s1153
        %v1155 = vmul.f32 %v1154, %v1071
        %v1156 = vmul.f32 %v1154, %v1072
        %1159 = vrot.lane.b32.xlu0 %v1155, 126
        %v1160 = vpop.permute.xlu0 %1159
        %1161 = vrot.lane.b32.xlu0 %v1156, 126
        %v1162 = vpop.permute.xlu0 %1161
        %v1165 = vadd.f32 %v1109, %v1160
        %v1166 = vadd.f32 %v1110, %v1162
        %s1167 = sld [smem:[#allocation8 + $0x91]]
        %v1168 = vstv %s1167
        %v1169 = vmul.f32 %v1168, %v1071
        %v1170 = vmul.f32 %v1168, %v1072
        %1173 = vrot.lane.b32.xlu0 %v1169, 126
        %v1174 = vpop.permute.xlu0 %1173
        %1175 = vrot.lane.b32.xlu0 %v1170, 126
        %v1176 = vpop.permute.xlu0 %1175
        %v1179 = vadd.f32 %v1123, %v1174
        %v1180 = vadd.f32 %v1124, %v1176
        %s1181 = sld [smem:[#allocation8 + $0x111]]
        %v1182 = vstv %s1181
        %v1183 = vmul.f32 %v1182, %v1071
        %v1184 = vmul.f32 %v1182, %v1072
        %1187 = vrot.lane.b32.xlu0 %v1183, 126
        %v1188 = vpop.permute.xlu0 %1187
        %1189 = vrot.lane.b32.xlu0 %v1184, 126
        %v1190 = vpop.permute.xlu0 %1189
        %v1193 = vadd.f32 %v1137, %v1188
        %v1194 = vadd.f32 %v1138, %v1190
        %s1195 = sld [smem:[#allocation8 + $0x191]]
        %v1196 = vstv %s1195
        %v1197 = vmul.f32 %v1196, %v1071
        %v1198 = vmul.f32 %v1196, %v1072
        %1201 = vrot.lane.b32.xlu0 %v1197, 126
        %v1202 = vpop.permute.xlu0 %1201
        %1203 = vrot.lane.b32.xlu0 %v1198, 126
        %v1204 = vpop.permute.xlu0 %1203
        %v1207 = vadd.f32 %v1151, %v1202
        %v1208 = vadd.f32 %v1152, %v1204
        %s1209 = sld [smem:[#allocation9]]
        %v1210 = vstv %s1209
        %v1211 = vadd.f32 %v1165, %v1210
        %v1212 = vadd.f32 %v1166, %v1210
        %v1213 = vmul.f32 %v1211, 0.1
        %v1214 = vmul.f32 %v1212, 0.1
        %v1215 = vmax.f32 %v1211, %v1213
        %v1216 = vmax.f32 %v1212, %v1214
        %v1217 = vadd.f32 %v1215, %v296
        %v1218 = vadd.f32 %v1216, %v297
        %vm1219 = vcmask 130048
        %1220 = vst.msk [vmem:[%s269] sm:$0xff] %vm1219, %v1217
        %1221 = vst.msk [vmem:[%s269 + $0x8] sm:$0xff] %vm1219, %v1218
        %s1222 = sld [smem:[#allocation9 + $0x1]]
        %v1223 = vstv %s1222
        %v1224 = vadd.f32 %v1179, %v1223
        %v1225 = vadd.f32 %v1180, %v1223
        %v1226 = vmul.f32 %v1224, 0.1
        %v1227 = vmul.f32 %v1225, 0.1
        %v1228 = vmax.f32 %v1224, %v1226
        %v1229 = vmax.f32 %v1225, %v1227
        %v1230 = vadd.f32 %v1228, %v299
        %v1231 = vadd.f32 %v1229, %v300
        %s1232 = scalar_lea.vmem %s269, 16 [#allocation11]
        %1233 = vst.msk [vmem:[%s1232] sm:$0xff] %vm1219, %v1230
        %1234 = vst.msk [vmem:[%s1232 + $0x8] sm:$0xff] %vm1219, %v1231
        %s1235 = sld [smem:[#allocation9 + $0x2]]
        %v1236 = vstv %s1235
        %v1237 = vadd.f32 %v1193, %v1236
        %v1238 = vadd.f32 %v1194, %v1236
        %v1239 = vmul.f32 %v1237, 0.1
        %v1240 = vmul.f32 %v1238, 0.1
        %v1241 = vmax.f32 %v1237, %v1239
        %v1242 = vmax.f32 %v1238, %v1240
        %v1243 = vadd.f32 %v1241, %v302
        %v1244 = vadd.f32 %v1242, %v303
        %s1245 = scalar_lea.vmem %s269, 32 [#allocation11]
        %1246 = vst.msk [vmem:[%s1245] sm:$0xff] %vm1219, %v1243
        %1247 = vst.msk [vmem:[%s1245 + $0x8] sm:$0xff] %vm1219, %v1244
        %s1248 = sld [smem:[#allocation9 + $0x3]]
        %v1249 = vstv %s1248
        %v1250 = vadd.f32 %v1207, %v1249
        %v1251 = vadd.f32 %v1208, %v1249
        %v1252 = vmul.f32 %v1250, 0.1
        %v1253 = vmul.f32 %v1251, 0.1
        %v1254 = vmax.f32 %v1250, %v1252
        %v1255 = vmax.f32 %v1251, %v1253
        %v1256 = vadd.f32 %v1254, %v305
        %v1257 = vadd.f32 %v1255, %v306
        %s1258 = scalar_lea.vmem %s269, 48 [#allocation11]
        %1259 = vst.msk [vmem:[%s1258] sm:$0xff] %vm1219, %v1256
        %1260 = vst.msk [vmem:[%s1258 + $0x8] sm:$0xff] %vm1219, %v1257
        %s1261 = sand.u32 %s140, 1
        %s1262 = scalar_lea.sflag [#allocation4], %s1261
        %s1263 = sand.u32 %s140, 1
        %s1264 = smul.addr %s1263, 64
        %s1265 = scalar_lea.vmem [#allocation11], %s1264
        // Predicated region
        $region57: #{basic_block.1} parent=39 // pred_check
          %p1266 = pneg %p150
        $region58: #{basic_block.1} parent=39 // pred_check_branch
          %1268 = sbr.rel (%p1266) target = $region60
        $region59: #{basic_block.1} parent=39 // pred_region
          %s1270 = ssub.s32 1024, 1024
          %1271 = vsyncadd %s1262, %s1270
          %s1272 = smul.addr %s22, 8
          %s1273 = smul.addr %s1272, 128
          %s1274 = scalar_lea.hbm %s5, %s1273
          %s1275 = sshll.u32 %s1265, 4
          %s1276 = int_to_ptr.vmem [resolvable:$true] %s1275
          %1281 = dma.vmem_to_hbm [thread:$0]  %s1276, 1024, %s1274, %s1262, 128, 128, 8
        $region60: #{basic_block.1} parent=39 // pred_fallthru
          _
      $region40: #{basic_block.1} parent=5 // pred_fallthru
        _
      %p1282 = scmp.le.s32.totalorder 2, %s17
      // Predicated region
      $region61: #{basic_block.1} parent=5 // pred_check
        %p1283 = pneg %p1282
      $region62: #{basic_block.1} parent=5 // pred_check_branch
        %1285 = sbr.rel (%p1283) target = $region64
      $region63: #{basic_block.1} parent=5 // pred_region
        %s1286 = ssub.s32 %s17, 2
        // Predicated region
        $region65: #{basic_block.1} parent=63 // pred_check
          %p1287 = pneg %p156
        $region66: #{basic_block.1} parent=63 // pred_check_branch
          %1289 = sbr.rel (%p1287) target = $region68
        $region67: #{basic_block.1} parent=63 // pred_region
          %s1290 = sand.u32 %s141, 1
          %s1291 = scalar_lea.sflag [#allocation4], %s1290
          %s1292 = sand.u32 %s141, 1
          %s1293 = smul.addr %s1292, 64
          %s1294 = scalar_lea.vmem [#allocation11], %s1293
          %1295 = dma.done %s1291, 1024
        $region68: #{basic_block.1} parent=63 // pred_fallthru
          _
      $region64: #{basic_block.1} parent=5 // pred_fallthru
        _
    $region6: #{basic_block.1} parent=1 // loop_footer
      %s21 = sadd.s32 1, %s17
    $region7: #{basic_block.1} parent=1 // loop_footer_branch
      %16 = sbr.rel target = $region3
    $region8: #{basic_block.1} parent=1 // loop_exit
      _
    %1296 = vsyncpa [#allocation4], 1
    %s1297 = scalar_lea.sflag [#allocation4], 1
    %1298 = vsyncpa %s1297, 1
    %1299 = vsyncpa [#allocation5], 1
    %s1300 = scalar_lea.sflag [#allocation5], 1
    %1301 = vsyncpa %s1300, 1
    %1302 = vsyncpa [#allocation7], 1
    %1303 = vsyncpa [#allocation10], 1

</llo_original>
